<compile_context>
chip_gen: v5e
topology: v5e:2x2
jax: 0.10.0
libtpu: 0.0.40
codegen_flags: <defaults>
</compile_context>

<pallas_src>
import math
import functools

import numpy as np
import jax
import jax.numpy as jnp
from jax import lax
from jax.experimental import pallas as pl
from jax.experimental.pallas import tpu as pltpu

SQRT2 = math.sqrt(2.0)
_BLUR_1D = (0.125, 0.375, 0.375, 0.125)          # separable [1,3,3,1]/8 blur taps
_VMEM_LIMIT = 40 * 1024 * 1024

_CONV_CP = pltpu.CompilerParams(dimension_semantics=("parallel", "arbitrary"),
                                vmem_limit_bytes=_VMEM_LIMIT)
_SMALL_CP = pltpu.CompilerParams(vmem_limit_bytes=_VMEM_LIMIT)


# ---------------------------------------------------------------------------
# in-kernel helpers
# ---------------------------------------------------------------------------

def _zero_pad_fill(pad_scr, x_ref, top, bottom, left, right):
    """Zero only the halo of pad_scr and copy x into the interior (in VMEM)."""
    Bp, Hp, Wp, C = pad_scr.shape
    H = Hp - top - bottom
    W = Wp - left - right
    dt = pad_scr.dtype
    if top:
        pad_scr[:, :top, :, :] = jnp.zeros((Bp, top, Wp, C), dt)
    if bottom:
        pad_scr[:, Hp - bottom:, :, :] = jnp.zeros((Bp, bottom, Wp, C), dt)
    if left:
        pad_scr[:, :, :left, :] = jnp.zeros((Bp, Hp, left, C), dt)
    if right:
        pad_scr[:, :, Wp - right:, :] = jnp.zeros((Bp, Hp, right, C), dt)
    pad_scr[:, top:top + H, left:left + W, :] = x_ref[...].astype(dt)


def _build_col(col_scr, src, K, stride, Ho, Wo):
    """im2col: col[(b,i,j), (ky,kx,c)] = src[b, i*stride+ky, j*stride+kx, c]."""
    B = src.shape[0]
    Cin = src.shape[3]
    M = B * Ho * Wo
    for ky in range(K):
        for kx in range(K):
            if stride == 1:
                win = src[:, ky:ky + Ho, kx:kx + Wo, :]
            else:
                win = src[:, pl.ds(ky, Ho, stride=stride),
                          pl.ds(kx, Wo, stride=stride), :]
            tap = ky * K + kx
            col_scr[:, tap * Cin:(tap + 1) * Cin] = win.reshape(M, Cin)


# ---------------------------------------------------------------------------
# Pallas kernels
# ---------------------------------------------------------------------------

def _conv_kernel(x_ref, w_ref, b_ref, *rest, K, stride, pad, blur_pads,
                 has_pre, has_post, activate, slope, post_scale):
    """Conv (cross-correlation), optionally with a fused [1,3,3,1] blur prologue.

    x_ref : (B, H, W, Cin)        bf16 full input (resident across grid steps)
    w_ref : (K*K*Cin, tco)        bf16 weights (EqualConv scale pre-folded)
    b_ref : (1, tco)              f32 bias
    pre   : (tb, Ho, Wo, tco)     optional f32 pre-activation additive term
    post  : (tb, Ho, Wo, tco)     optional f32 post-activation additive term
    o_ref : (tb, Ho, Wo, tco)
    grid  : (Cout//tco [parallel], B//tb [arbitrary])
    """
    idx = 0
    pre_ref = post_ref = None
    if has_pre:
        pre_ref = rest[idx]; idx += 1
    if has_post:
        post_ref = rest[idx]; idx += 1
    o_ref = rest[idx]; idx += 1
    scr = rest[idx:]

    B, H, W, Cin = x_ref.shape
    tb, Ho, Wo, tco = o_ref.shape
    Mt = tb * Ho * Wo

    m = pl.program_id(1)

    col_scr = None
    if blur_pads is not None:
        pad_scr, tmp_scr, blur_scr, col_scr = scr
        p0, p1 = blur_pads
        _, _, Wp, _ = pad_scr.shape
        _, Hb, Wb, _ = blur_scr.shape

        @pl.when(m == 0)
        def _prologue():
            # zero-pad (halo only) into VMEM, then separable 4-tap blur (f32 accum)
            _zero_pad_fill(pad_scr, x_ref, p0, p1, p0, p1)
            acc = None
            for t in range(4):
                v = pad_scr[:, t:t + Hb, :, :].astype(jnp.float32) * _BLUR_1D[t]
                acc = v if acc is None else acc + v
            tmp_scr[...] = acc
            acc = None
            for t in range(4):
                v = tmp_scr[:, :, t:t + Wb, :] * _BLUR_1D[t]
                acc = v if acc is None else acc + v
            blur_scr[...] = acc.astype(blur_scr.dtype)
            # strided im2col straight from the blurred buffer (stride-2 downsample)
            _build_col(col_scr, blur_scr, K, stride, Ho, Wo)

    elif pad > 0:
        pad_scr, col_scr = scr

        @pl.when(m == 0)
        def _prologue():
            _zero_pad_fill(pad_scr, x_ref, pad, pad, pad, pad)
            _build_col(col_scr, pad_scr, K, 1, Ho, Wo)

    # one MXU dot over the full K*K*Cin contraction for this (co-tile, m-tile)
    if col_scr is not None:
        start = pl.multiple_of(m * Mt, Mt)
        rows = col_scr[pl.ds(start, Mt), :]
    else:                                   # K == 1, stride == 1, no padding
        rows = x_ref[pl.ds(m * tb, tb)].reshape(Mt, Cin)

    acc = jnp.dot(rows, w_ref[...], preferred_element_type=jnp.float32)
    acc = acc + b_ref[...]
    if has_pre:
        acc = acc + pre_ref[...].reshape(Mt, tco)
    if activate:
        acc = jnp.where(acc >= 0.0, acc, acc * slope) * post_scale
    if has_post:
        acc = acc + post_ref[...].reshape(Mt, tco)
    o_ref[...] = acc.reshape(tb, Ho, Wo, tco).astype(o_ref.dtype)


def _stddev_kernel(x_ref, o_ref, *, group):
    """StyleGAN2 minibatch-stddev statistic (stddev_feat == 1): one scalar per group."""
    x = x_ref[...].astype(jnp.float32)               # (B, H, W, C)
    B = x.shape[0]
    n = B // group
    mean = x[0:n]
    for g in range(1, group):
        mean = mean + x[g * n:(g + 1) * n]
    mean = mean / group
    var = (x[0:n] - mean) * (x[0:n] - mean)
    for g in range(1, group):
        d = x[g * n:(g + 1) * n] - mean
        var = var + d * d
    var = var / group                                 # unbiased=False
    std = jnp.sqrt(var + 1e-8)
    m1 = jnp.mean(std, axis=3, keepdims=True)
    m2 = jnp.mean(m1, axis=2, keepdims=True)
    m3 = jnp.mean(m2, axis=1, keepdims=True)          # (n, 1, 1, 1)
    o_ref[...] = m3.reshape(n, 1)


def _final_linear_kernel(x_ref, w1_ref, b1_ref, w2_ref, b2_ref, o_ref):
    """Fused final_linear: EqualLinear(8192,512,'fused_lrelu') -> EqualLinear(512,1)."""
    h = jnp.dot(x_ref[...], w1_ref[...], preferred_element_type=jnp.float32)
    h = h + b1_ref[...]
    h = jnp.where(h >= 0.0, h, 0.2 * h) * SQRT2
    z = jnp.dot(h, w2_ref[...], preferred_element_type=jnp.float32)
    o_ref[...] = z + b2_ref[...]


def _joint_kernel(h_ref, cc_ref, jw_ref, jb_ref, jm_ref, ow_ref, ob_ref, o_ref,
                  pad_scr, col_scr, ex_scr):
    """COND_DNET: SN-conv3x3(h ++ c_code) + LeakyReLU + Conv(4,stride 4) + Sigmoid."""
    B, Hh, Wh, C = h_ref.shape
    Cout = jw_ref.shape[1]
    T = Hh * Wh
    M = B * T

    # 3x3 conv on the 512-channel activation; the spatially-constant c_code channels
    # are an exact per-position rank-1 correction (jm), keeping Cin lane-aligned.
    _zero_pad_fill(pad_scr, h_ref, 1, 1, 1, 1)
    _build_col(col_scr, pad_scr, 3, 1, Hh, Wh)
    acc = jnp.dot(col_scr[...], jw_ref[...], preferred_element_type=jnp.float32)
    acc = acc + jb_ref[...]
    for t in range(T):
        ex_scr[:, t, :] = jnp.dot(cc_ref[...], jm_ref[t],
                                  preferred_element_type=jnp.float32)
    acc = acc + ex_scr[...].reshape(M, Cout)
    h_act = jnp.where(acc >= 0.0, acc, 0.2 * acc)                 # LeakyReLU(0.2)

    # outlogits: Conv2d(C, 1, 4, stride=4) on the 4x4 map == weighted full reduce
    prod = h_act * jnp.tile(ow_ref[...], (B, 1))                  # (M, Cout)
    psum = jnp.sum(prod, axis=1, keepdims=True)                   # (M, 1)
    rid = lax.broadcasted_iota(jnp.int32, (B, M), 0)
    cid = lax.broadcasted_iota(jnp.int32, (B, M), 1)
    sel = (cid // T == rid).astype(jnp.float32)                   # (B, M) block mask
    z = jnp.dot(sel, psum, preferred_element_type=jnp.float32) + ob_ref[...]
    o_ref[...] = 1.0 / (1.0 + jnp.exp(-z))                        # Sigmoid


# ---------------------------------------------------------------------------
# pallas_call wrappers
# ---------------------------------------------------------------------------

def conv2d(x, w, b, *, K, stride=1, pad=0, blur_pads=None, activate=True,
           slope=0.2, post_scale=1.0, pre=None, post=None, out_dtype=jnp.bfloat16):
    B, H, W, Cin = x.shape
    KKC, Cout = w.shape
    assert KKC == K * K * Cin
    if blur_pads is not None:
        p0, p1 = blur_pads
        Hb, Wb = H + p0 + p1 - 3, W + p0 + p1 - 3
        Ho = (Hb - K) // stride + 1
        Wo = (Wb - K) // stride + 1
    else:
        Ho = (H + 2 * pad - K) // stride + 1
        Wo = (W + 2 * pad - K) // stride + 1

    tco = 256 if Cout % 256 == 0 else (128 if Cout % 128 == 0 else Cout)
    tb = max(1, min(B, 512 // (Ho * Wo)))       # ~512 matmul rows per grid step
    while B % tb:
        tb -= 1
    assert Cout % tco == 0 and B % tb == 0
    grid = (Cout // tco, B // tb)

    in_specs = [
        pl.BlockSpec((B, H, W, Cin), lambda c, m: (0, 0, 0, 0)),
        pl.BlockSpec((KKC, tco), lambda c, m: (0, c)),
        pl.BlockSpec((1, tco), lambda c, m: (0, c)),
    ]
    args = [x.astype(jnp.bfloat16), w, b]
    if pre is not None:
        in_specs.append(pl.BlockSpec((tb, Ho, Wo, tco), lambda c, m: (m, 0, 0, c)))
        args.append(pre.astype(jnp.float32))
    if post is not None:
        in_specs.append(pl.BlockSpec((tb, Ho, Wo, tco), lambda c, m: (m, 0, 0, c)))
        args.append(post.astype(jnp.float32))

    scratch = []
    if blur_pads is not None:
        Hp, Wp = H + p0 + p1, W + p0 + p1
        scratch = [pltpu.VMEM((B, Hp, Wp, Cin), jnp.bfloat16),
                   pltpu.VMEM((B, Hb, Wp, Cin), jnp.float32),
                   pltpu.VMEM((B, Hb, Wb, Cin), jnp.bfloat16),
                   pltpu.VMEM((B * Ho * Wo, KKC), jnp.bfloat16)]
    elif pad > 0:
        scratch = [pltpu.VMEM((B, H + 2 * pad, W + 2 * pad, Cin), jnp.bfloat16),
                   pltpu.VMEM((B * Ho * Wo, KKC), jnp.bfloat16)]

    kern = functools.partial(_conv_kernel, K=K, stride=stride, pad=pad,
                             blur_pads=blur_pads, has_pre=pre is not None,
                             has_post=post is not None, activate=activate,
                             slope=slope, post_scale=post_scale)
    return pl.pallas_call(
        kern,
        out_shape=jax.ShapeDtypeStruct((B, Ho, Wo, Cout), out_dtype),
        grid_spec=pltpu.PrefetchScalarGridSpec(
            num_scalar_prefetch=0, grid=grid,
            in_specs=in_specs,
            out_specs=pl.BlockSpec((tb, Ho, Wo, tco), lambda c, m: (m, 0, 0, c)),
            scratch_shapes=scratch),
        compiler_params=_CONV_CP,
    )(*args)


def minibatch_stddev_scalar(x, group):
    B, H, W, C = x.shape
    n = B // group
    kern = functools.partial(_stddev_kernel, group=group)
    return pl.pallas_call(
        kern,
        out_shape=jax.ShapeDtypeStruct((n, 1), jnp.float32),
        grid_spec=pltpu.PrefetchScalarGridSpec(
            num_scalar_prefetch=0, grid=(1,),
            in_specs=[pl.BlockSpec((B, H, W, C), lambda i: (0, 0, 0, 0))],
            out_specs=pl.BlockSpec((n, 1), lambda i: (0, 0))),
        compiler_params=_SMALL_CP,
    )(x)


def final_linear(flat, w1, b1, w2, b2):
    B, Fin = flat.shape
    Fmid = w1.shape[1]
    return pl.pallas_call(
        _final_linear_kernel,
        out_shape=jax.ShapeDtypeStruct((B, 1), jnp.float32),
        grid_spec=pltpu.PrefetchScalarGridSpec(
            num_scalar_prefetch=0, grid=(1,),
            in_specs=[pl.BlockSpec((B, Fin), lambda i: (0, 0)),
                      pl.BlockSpec((Fin, Fmid), lambda i: (0, 0)),
                      pl.BlockSpec((1, Fmid), lambda i: (0, 0)),
                      pl.BlockSpec((Fmid, 1), lambda i: (0, 0)),
                      pl.BlockSpec((1, 1), lambda i: (0, 0))],
            out_specs=pl.BlockSpec((B, 1), lambda i: (0, 0))),
        compiler_params=_SMALL_CP,
    )(flat.astype(jnp.bfloat16), w1, b1, w2, b2)


def cond_dnet(p, h, c_code):
    B, Hh, Wh, C = h.shape
    nef = p["nef"]
    out = pl.pallas_call(
        _joint_kernel,
        out_shape=jax.ShapeDtypeStruct((B, 1), jnp.float32),
        grid_spec=pltpu.PrefetchScalarGridSpec(
            num_scalar_prefetch=0, grid=(1,),
            in_specs=[pl.BlockSpec((B, Hh, Wh, C), lambda i: (0, 0, 0, 0)),
                      pl.BlockSpec((B, nef), lambda i: (0, 0)),
                      pl.BlockSpec((9 * C, C), lambda i: (0, 0)),
                      pl.BlockSpec((1, C), lambda i: (0, 0)),
                      pl.BlockSpec((Hh * Wh, nef, C), lambda i: (0, 0, 0)),
                      pl.BlockSpec((Hh * Wh, C), lambda i: (0, 0)),
                      pl.BlockSpec((1, 1), lambda i: (0, 0))],
            out_specs=pl.BlockSpec((B, 1), lambda i: (0, 0)),
            scratch_shapes=[pltpu.VMEM((B, Hh + 2, Wh + 2, C), jnp.bfloat16),
                            pltpu.VMEM((B * Hh * Wh, 9 * C), jnp.bfloat16),
                            pltpu.VMEM((B, Hh * Wh, C), jnp.float32)]),
        compiler_params=_SMALL_CP,
    )(h.astype(jnp.bfloat16), c_code.astype(jnp.float32),
      p["jw"], p["jb"], p["jm"], p["ow"], p["ob"])
    return out.reshape(-1)


# ---------------------------------------------------------------------------
# Parameters (deterministic synthetic init mirroring the module's __init__)
# ---------------------------------------------------------------------------

def _arrange_conv_w(w_oikk, scale):
    O, I, K, _ = w_oikk.shape
    wt = jnp.transpose(w_oikk, (2, 3, 1, 0)).reshape(K * K * I, O)
    return (wt * scale).astype(jnp.bfloat16)


def _const_channel_map(w_extra, H, W, K, pad):
    """M[y,x,e,o] s.t. conv of spatially-constant extra channels == einsum('be,yxeo->byxo')."""
    ones_p = np.zeros((H + 2 * pad, W + 2 * pad), np.float32)
    ones_p[pad:pad + H, pad:pad + W] = 1.0
    maps = np.stack([np.stack([ones_p[ky:ky + H, kx:kx + W] for kx in range(K)], 0)
                     for ky in range(K)], 0)                       # (K, K, H, W)
    wt = jnp.transpose(w_extra, (2, 3, 1, 0)).astype(jnp.float32)  # (K, K, E, O)
    return jnp.einsum('uvyx,uveo->yxeo', jnp.asarray(maps), wt)    # (H, W, E, O)


def _spectral_normalize(w_oihw, n_iter=30):
    # TODO(synk): PyTorch SpectralNorm carries (u, v) power-iteration state from training;
    # here we normalize the randomly-initialized weight by its converged spectral norm.
    O = w_oihw.shape[0]
    wm = w_oihw.reshape(O, -1)
    u = jnp.ones((O,), jnp.float32) / math.sqrt(O)
    v = jnp.ones((wm.shape[1],), jnp.float32) / math.sqrt(wm.shape[1])
    for _ in range(n_iter):
        u = wm @ v
        u = u / (jnp.linalg.norm(u) + 1e-12)
        v = wm.T @ u
        v = v / (jnp.linalg.norm(v) + 1e-12)
    sigma = u @ (wm @ v)
    return w_oihw / sigma


def _convlayer_params(key, in_ch, out_ch, k, downsample=False, activate=True,
                      extra_scale=1.0, in_pad_to=None):
    w = jax.random.normal(key, (out_ch, in_ch, k, k), jnp.float32)   # EqualConv2d: randn
    scale = extra_scale / math.sqrt(in_ch * k * k)
    if in_pad_to is not None and in_pad_to > in_ch:
        w = jnp.concatenate(
            [w, jnp.zeros((out_ch, in_pad_to - in_ch, k, k), jnp.float32)], axis=1)
    p = dict(w=_arrange_conv_w(w, scale), k=k, downsample=downsample,
             activate=activate, bias=jnp.zeros((1, out_ch), jnp.float32))
    if downsample:
        pp = (4 - 2) + (k - 1)                 # len(blur_kernel) - factor + (k - 1)
        p["blur_pads"] = ((pp + 1) // 2, pp // 2)
    return p


def init_pixel_discriminator(key, size=16, channel_multiplier=2, input_size=3,
                             n_first_layers=0, nef=32):
    channels = {4: 512, 8: 512, 16: 512, 32: 512,
                64: 256 * channel_multiplier, 128: 128 * channel_multiplier,
                256: 64 * channel_multiplier, 512: 32 * channel_multiplier,
                1024: 16 * channel_multiplier}
    keys = iter(jax.random.split(key, 64))

    layers = [("conv", _convlayer_params(next(keys), input_size, channels[size], 1,
                                         in_pad_to=8))]
    for _ in range(n_first_layers):
        layers.append(("conv", _convlayer_params(next(keys), channels[size],
                                                 channels[size], 3)))
    log_size = int(math.log(size, 2))
    in_ch = channels[size]
    for i in range(log_size, 2, -1):
        out_ch = channels[2 ** (i - 1)]
        layers.append(("res", dict(
            conv1=_convlayer_params(next(keys), in_ch, in_ch, 3),
            conv2=_convlayer_params(next(keys), in_ch, out_ch, 3, downsample=True),
            # skip has no bias / activation; fold the resblock's 1/sqrt(2) into its scale
            skip=_convlayer_params(next(keys), in_ch, out_ch, 1, downsample=True,
                                   activate=False, extra_scale=1.0 / SQRT2))))
        in_ch = out_ch

    c4 = channels[4]
    # final_conv: EqualConv2d(in_ch+1, c4, 3, pad=1) + FusedLeakyReLU; the 513th input
    # channel (minibatch stddev, spatially constant) is a rank-1 pre-activation fold.
    wf = jax.random.normal(next(keys), (c4, in_ch + 1, 3, 3), jnp.float32)
    fscale = 1.0 / math.sqrt((in_ch + 1) * 9)
    final_conv = dict(
        w=_arrange_conv_w(wf[:, :in_ch], fscale),
        bias=jnp.zeros((1, c4), jnp.float32),
        M=(fscale * _const_channel_map(wf[:, in_ch:in_ch + 1], 4, 4, 3, 1)[:, :, 0, :]
           ).astype(jnp.float32))                                  # (4, 4, c4)

    # final_linear: EqualLinear(c4*16, c4, 'fused_lrelu') -> EqualLinear(c4, 1);
    # fl1 rows permuted so the kernel consumes the NHWC-flattened activation directly.
    w1 = jax.random.normal(next(keys), (c4, c4 * 16), jnp.float32)
    s1 = 1.0 / math.sqrt(c4 * 16)
    fl1_w = (jnp.transpose(w1.reshape(c4, c4, 4, 4), (2, 3, 1, 0)).reshape(c4 * 16, c4)
             * s1).astype(jnp.bfloat16)
    w2 = jax.random.normal(next(keys), (1, c4), jnp.float32)
    fl2_w = (w2.T * (1.0 / math.sqrt(c4))).astype(jnp.float32)

    # COND_DNET: SpectralNorm(conv3x3(c4+nef, c4, bias)) + LeakyReLU(0.2);
    #            Conv2d(c4, 1, 4, stride=4) + Sigmoid
    jw_raw = 0.05 * jax.random.normal(next(keys), (c4, c4 + nef, 3, 3), jnp.float32)
    jw_sn = _spectral_normalize(jw_raw)
    out_w = 0.02 * jax.random.normal(next(keys), (1, c4, 4, 4), jnp.float32)
    cond = dict(
        nef=nef,
        jw=_arrange_conv_w(jw_sn[:, :c4], 1.0),                    # (9*c4, c4) bf16
        jm=_const_channel_map(jw_sn[:, c4:], 4, 4, 3, 1)
            .reshape(16, nef, c4).astype(jnp.float32),
        jb=(0.01 * jax.random.normal(next(keys), (1, c4))).astype(jnp.float32),
        ow=jnp.transpose(out_w[0], (1, 2, 0)).reshape(16, c4).astype(jnp.float32),
        ob=(0.01 * jax.random.normal(next(keys), (1, 1))).astype(jnp.float32))

    return dict(layers=layers, in_pad_to=8, final_conv=final_conv,
                fl1_w=fl1_w, fl1_b=jnp.zeros((1, c4), jnp.float32),
                fl2_w=fl2_w, fl2_b=jnp.zeros((1, 1), jnp.float32),
                cond=cond)


# ---------------------------------------------------------------------------
# Forward pass
# ---------------------------------------------------------------------------

def apply_convlayer(p, x, post=None, out_dtype=jnp.bfloat16):
    k = p["k"]
    act = p["activate"]
    # FusedLeakyReLU multiplies by sqrt(2); when the residual add is fused (post given)
    # the trailing /sqrt(2) cancels it, so post_scale becomes 1.
    post_scale = SQRT2 if (act and post is None) else 1.0
    if p["downsample"]:
        return conv2d(x, p["w"], p["bias"], K=k, stride=2, pad=0,
                      blur_pads=p["blur_pads"], activate=act,
                      post_scale=post_scale, post=post, out_dtype=out_dtype)
    return conv2d(x, p["w"], p["bias"], K=k, stride=1, pad=k // 2,
                  activate=act, post_scale=post_scale, post=post,
                  out_dtype=out_dtype)


def apply_resblock(p, x):
    out1 = apply_convlayer(p["conv1"], x)
    skip = apply_convlayer(p["skip"], x, out_dtype=jnp.float32)   # already / sqrt(2)
    # conv2 with the residual combine fused into its epilogue
    return apply_convlayer(p["conv2"], out1, post=skip)


def pixel_discriminator_forward(params, image_nchw, c_code=None):
    B = image_nchw.shape[0]
    x = jnp.transpose(image_nchw, (0, 2, 3, 1)).astype(jnp.bfloat16)   # NCHW -> NHWC
    cin = x.shape[-1]
    if cin < params["in_pad_to"]:
        x = jnp.pad(x, ((0, 0), (0, 0), (0, 0), (0, params["in_pad_to"] - cin)))

    for kind, p in params["layers"]:
        x = apply_convlayer(p, x) if kind == "conv" else apply_resblock(p, x)

    # minibatch stddev (stddev_group=4, stddev_feat=1): per-sample scalar; its
    # contribution to final_conv is a rank-1 pre-activation correction (exact).
    group = min(B, 4)
    n = B // group
    s = minibatch_stddev_scalar(x, group)                       # (n, 1)
    s_full = jnp.tile(s.reshape(n), (group,))                   # sample b gets s[b % n]
    fc = params["final_conv"]
    extra = s_full[:, None, None, None].astype(jnp.float32) * fc["M"][None]
    h = conv2d(x, fc["w"], fc["bias"], K=3, stride=1, pad=1,
               activate=True, post_scale=SQRT2, pre=extra)      # (B, 4, 4, 512)

    cond_logits = cond_dnet(params["cond"], h, c_code) if c_code is not None else None

    flat = h.reshape(B, -1)          # NHWC flatten; fl1_w rows permuted to match
    out = final_linear(flat, params["fl1_w"], params["fl1_b"],
                       params["fl2_w"], params["fl2_b"])
    return out, cond_logits


# ---------------------------------------------------------------------------

if __name__ == "__main__":
    key = jax.random.PRNGKey(0)
    kp, kimg, kcond = jax.random.split(key, 3)

    SIZE = 16      # input resolution (down-sampled to 4x4 by the ResBlocks)
    NEF = 32       # cfg.TEXT.EMBEDDING_DIM (synthetic choice)
    BATCH = 4      # = stddev_group so minibatch-stddev uses one full group

    params = init_pixel_discriminator(kp, size=SIZE, channel_multiplier=2,
                                      input_size=3, n_first_layers=0, nef=NEF)
    image = jax.random.normal(kimg, (BATCH, 3, SIZE, SIZE), jnp.float32)   # NCHW
    c_code = jax.random.normal(kcond, (BATCH, NEF), jnp.float32)

    out, cond_logits = pixel_discriminator_forward(params, image, c_code)
    jax.block_until_ready((out, cond_logits))

    assert out.shape == (BATCH, 1), out.shape
    assert cond_logits.shape == (BATCH,), cond_logits.shape
    assert bool(jnp.all(jnp.isfinite(out))) and bool(jnp.all(jnp.isfinite(cond_logits)))
    print("KERNEL_OK")
</pallas_src>

<mosaic_0001>
module attributes {stable_mosaic.version = 11 : i64} {
  func.func @_conv_kernel(%arg0: i32, %arg1: i32, %arg2: memref<4x16x16x8xbf16, #tpu.memory_space<vmem>>, %arg3: memref<8x256xbf16, #tpu.memory_space<vmem>>, %arg4: memref<1x256xf32, #tpu.memory_space<vmem>>, %arg5: memref<2x16x16x256xbf16, #tpu.memory_space<vmem>>) attributes {dimension_semantics = [#tpu.dimension_semantics<parallel>, #tpu.dimension_semantics<arbitrary>], iteration_bounds = array<i64: 2, 2>, scalar_prefetch = 0 : i64, scratch_operands = 0 : i64, tpu.core_type = #tpu.core_type<tc>, window_params = [{pipeline_mode = #tpu.pipeline_mode<synchronous>, transform_indices = @transform_0, window_bounds = array<i64: 4, 16, 16, 8>}, {transform_indices = @transform_1, window_bounds = array<i64: 8, 256>}, {transform_indices = @transform_2, window_bounds = array<i64: 1, 256>}, {transform_indices = @transform_3, window_bounds = array<i64: 2, 16, 16, 256>}]} {
    %c2_i32 = arith.constant 2 : i32
    %0 = arith.muli %arg1, %c2_i32 : i32
    %1 = arith.index_cast %0 : i32 to index
    %c0 = arith.constant 0 : index
    %c0_0 = arith.constant 0 : index
    %c0_1 = arith.constant 0 : index
    %2 = vector.load %arg2[%1, %c0, %c0_0, %c0_1] : memref<4x16x16x8xbf16, #tpu.memory_space<vmem>>, vector<2x16x16x8xbf16>
    %3 = vector.shape_cast %2 : vector<2x16x16x8xbf16> to vector<512x8xbf16>
    %c0_2 = arith.constant 0 : index
    %c0_3 = arith.constant 0 : index
    %4 = vector.load %arg3[%c0_2, %c0_3] : memref<8x256xbf16, #tpu.memory_space<vmem>>, vector<8x256xbf16>
    %cst = arith.constant dense<0.000000e+00> : vector<512x256xf32>
    %5 = tpu.matmul %3, %4, %cst {dimension_numbers = #tpu.dot_dimension_numbers<[1], [0], [0], [1], [0, 0, 1, 1], [], []>} : vector<512x8xbf16>, vector<8x256xbf16>, vector<512x256xf32> -> vector<512x256xf32>
    %c0_4 = arith.constant 0 : index
    %c0_5 = arith.constant 0 : index
    %6 = vector.load %arg4[%c0_4, %c0_5] : memref<1x256xf32, #tpu.memory_space<vmem>>, vector<1x256xf32>
    %7 = vector.broadcast %6 : vector<1x256xf32> to vector<512x256xf32>
    %8 = arith.addf %5, %7 : vector<512x256xf32>
    %cst_6 = arith.constant 0.000000e+00 : f32
    %9 = vector.broadcast %cst_6 : f32 to vector<512x256xf32>
    %10 = arith.cmpf oge, %8, %9 : vector<512x256xf32>
    %cst_7 = arith.constant 2.000000e-01 : f32
    %11 = vector.broadcast %cst_7 : f32 to vector<512x256xf32>
    %12 = arith.mulf %8, %11 : vector<512x256xf32>
    %13 = arith.select %10, %8, %12 : vector<512x256xi1>, vector<512x256xf32>
    %cst_8 = arith.constant 1.41421354 : f32
    %14 = vector.broadcast %cst_8 : f32 to vector<512x256xf32>
    %15 = arith.mulf %13, %14 : vector<512x256xf32>
    %16 = vector.shape_cast %15 : vector<512x256xf32> to vector<2x16x16x256xf32>
    %17 = arith.truncf %16 : vector<2x16x16x256xf32> to vector<2x16x16x256xbf16>
    %c0_9 = arith.constant 0 : index
    %c0_10 = arith.constant 0 : index
    %c0_11 = arith.constant 0 : index
    %c0_12 = arith.constant 0 : index
    %18 = vector.load %arg5[%c0_9, %c0_10, %c0_11, %c0_12] : memref<2x16x16x256xbf16, #tpu.memory_space<vmem>>, vector<2x16x16x256xbf16>
    tpu.vector_store %arg5[%c0_9, %c0_10, %c0_11, %c0_12], %17 {strides = array<i32>} : memref<2x16x16x256xbf16, #tpu.memory_space<vmem>>, vector<2x16x16x256xbf16>,
    return
  }
  func.func @transform_0(%arg0: i32, %arg1: i32) -> (i32, i32, i32, i32) {
    %c0_i32 = arith.constant 0 : i32
    %c0_i32_0 = arith.constant 0 : i32
    %c0_i32_1 = arith.constant 0 : i32
    %c0_i32_2 = arith.constant 0 : i32
    %c0_i32_3 = arith.constant 0 : i32
    return %c0_i32, %c0_i32_0, %c0_i32_1, %c0_i32_2 : i32, i32, i32, i32
  }
  func.func @transform_1(%arg0: i32, %arg1: i32) -> (i32, i32) {
    %c0_i32 = arith.constant 0 : i32
    %c0_i32_0 = arith.constant 0 : i32
    return %c0_i32, %arg0 : i32, i32
  }
  func.func @transform_2(%arg0: i32, %arg1: i32) -> (i32, i32) {
    %c0_i32 = arith.constant 0 : i32
    %c0_i32_0 = arith.constant 0 : i32
    return %c0_i32, %arg0 : i32, i32
  }
  func.func @transform_3(%arg0: i32, %arg1: i32) -> (i32, i32, i32, i32) {
    %c0_i32 = arith.constant 0 : i32
    %c0_i32_0 = arith.constant 0 : i32
    %c0_i32_1 = arith.constant 0 : i32
    return %arg1, %c0_i32, %c0_i32_0, %arg0 : i32, i32, i32, i32
  }
}

</mosaic_0001>

<llo_original>
// kernel: tpu_custom_call.1
$region0: #{tpu_custom_call.1}
  #allocation0 [shape = 'u32[]', space=smem, size = 0x4, offset = 0x4, fixed_abs, tag = 'smem constant byte address 0x4 - core index']
  #allocation1 [shape = 'u32[72,128]{1,0:T(1,128)}', space=vmem, size = 0x9000, scoped, tag = 'internal scratch']
  %s0 = inlined_call_operand.vmem [shape: bf16[4,16,16,8], index: 0, kind: input, shape index: {}]
  %s1 = inlined_call_operand.vmem [shape: bf16[8,512], index: 1, kind: input, shape index: {}]
  %s2 = inlined_call_operand.vmem [shape: f32[1,512], index: 2, kind: input, shape index: {}]
  %s3 = inlined_call_operand.hbm [shape: bf16[4,16,16,512], index: 3, kind: output, shape index: {}]
  %s4 = sld [smem:[#allocation0]]
  $region45: #{tpu_custom_call.1} parent=0
    _
  %s6 = ssub.s32 1, %s4
  %s7 = scalar_select 0, %s6, %s4
  $region1: #{tpu_custom_call.1} parent=0
    #allocation2 [shape = 'u8[524288]{0}', space=vmem, size = 0x80000, scoped, tag = 'output window, operand 0']
    #allocation3 [shape = 's32[2]{0}', space=sflag, size = 0x8, scoped, tag = 'scoped memory for tpu_custom_call.1']
    %8 = vsyncpa [#allocation3], 0
    %s9 = scalar_lea.sflag [#allocation3], 1
    %10 = vsyncpa %s9, 0
    loop: start=0, step=1, limit=6
    $region2: #{tpu_custom_call.1} parent=1 // loop_pre_header
      _
    $region3: #{tpu_custom_call.1} parent=1 // loop_header
      %s12 = sphi 0, %s16
      %p13 = scmp.ge.s32.totalorder %s12, 6
      %s19 = sphi 0, %s31
      %s20 = sphi 0, %s27
      %s21 = sphi 0, %s19
      %s22 = sphi 0, %s20
      %s23 = sphi 0, %s21
      %s24 = sphi 0, %s22
      %s32 = sphi 0, %s32
      %s34 = sphi 0, %s32
      %s35 = sphi 0, %s34
      %s49 = sphi 0, %s35
      %s55 = sphi 0, %s57
      %s58 = sphi 0, %s55
      %s59 = sphi 0, %s58
      %s75 = sphi 0, %s59
      %s81 = sphi 0, %s83
      %s84 = sphi 0, %s81
      %s85 = sphi 0, %s84
      %s101 = sphi 0, %s85
      %s109 = sphi 0, %s111
      %s112 = sphi 0, %s109
      %s113 = sphi 0, %s112
      %s129 = sphi 0, %s113
    $region4: #{tpu_custom_call.1} parent=1 // loop_header_branch
      %15 = sbr.rel (%p13) target = $region8
    $region5: #{tpu_custom_call.1} parent=1 // loop_body
      %s17 = ssub.s32 %s12, 1
      %s18 = ssub.s32 %s12, 2
      %s25 = sadd.s32 1, %s20
      %p26 = scmp.ge.s32.totalorder %s25, 2
      %s27 = scalar_select %p26, 0, %s25
      %s28 = sadd.s32 1, %s19
      %s29 = scalar_select %p26, %s28, %s19
      %p30 = scmp.ge.s32.totalorder %s29, 2
      %s31 = scalar_select %p30, 0, %s29
      %s33 = sadd.s32 %s32, 1
      %p36 = scmp.eq.s32.totalorder %s12, 3
      %p37 = scmp.ne.s32.totalorder %s32, %s34
      %p38 = scmp.eq.s32.totalorder %s12, 0
      %p39 = por %p37, %p38
      %p40 = scmp.ne.s32.totalorder %s32, %s34
      %p41 = scmp.eq.s32.totalorder %s17, 3
      %p42 = por %p40, %p41
      %p43 = scmp.ne.s32.totalorder %s34, %s35
      %p44 = scmp.eq.s32.totalorder %s17, 0
      %p45 = por %p43, %p44
      %p46 = scmp.ne.s32.totalorder %s34, %s35
      %p47 = scmp.eq.s32.totalorder %s18, 3
      %p48 = por %p46, %p47
      %p50 = scmp.ne.s32.totalorder %s35, %s49
      %p51 = scmp.eq.s32.totalorder %s18, 0
      %p52 = por %p50, %p51
      %s53 = ssub.s32 %s19, %s31
      %p54 = scmp.eq.s32.totalorder %s53, 0
      %s56 = sadd.s32 %s55, 1
      %s57 = scalar_select %p54, %s55, %s56
      %p60 = pneg %p54
      %p61 = scmp.eq.s32.totalorder %s12, 3
      %p62 = por %p60, %p61
      %p63 = scmp.ne.s32.totalorder %s55, %s58
      %p64 = scmp.eq.s32.totalorder %s12, 0
      %p65 = por %p63, %p64
      %p66 = scmp.ne.s32.totalorder %s55, %s58
      %p67 = scmp.eq.s32.totalorder %s17, 3
      %p68 = por %p66, %p67
      %p69 = scmp.ne.s32.totalorder %s58, %s59
      %p70 = scmp.eq.s32.totalorder %s17, 0
      %p71 = por %p69, %p70
      %p72 = scmp.ne.s32.totalorder %s58, %s59
      %p73 = scmp.eq.s32.totalorder %s18, 3
      %p74 = por %p72, %p73
      %p76 = scmp.ne.s32.totalorder %s59, %s75
      %p77 = scmp.eq.s32.totalorder %s18, 0
      %p78 = por %p76, %p77
      %s79 = ssub.s32 %s19, %s31
      %p80 = scmp.eq.s32.totalorder %s79, 0
      %s82 = sadd.s32 %s81, 1
      %s83 = scalar_select %p80, %s81, %s82
      %p86 = pneg %p80
      %p87 = scmp.eq.s32.totalorder %s12, 3
      %p88 = por %p86, %p87
      %p89 = scmp.ne.s32.totalorder %s81, %s84
      %p90 = scmp.eq.s32.totalorder %s12, 0
      %p91 = por %p89, %p90
      %p92 = scmp.ne.s32.totalorder %s81, %s84
      %p93 = scmp.eq.s32.totalorder %s17, 3
      %p94 = por %p92, %p93
      %p95 = scmp.ne.s32.totalorder %s84, %s85
      %p96 = scmp.eq.s32.totalorder %s17, 0
      %p97 = por %p95, %p96
      %p98 = scmp.ne.s32.totalorder %s84, %s85
      %p99 = scmp.eq.s32.totalorder %s18, 3
      %p100 = por %p98, %p99
      %p102 = scmp.ne.s32.totalorder %s85, %s101
      %p103 = scmp.eq.s32.totalorder %s18, 0
      %p104 = por %p102, %p103
      %s105 = ssub.s32 %s20, %s27
      %s106 = ssub.s32 %s19, %s31
      %s107 = sor.u32 %s105, %s106
      %p108 = scmp.eq.s32.totalorder %s107, 0
      %s110 = sadd.s32 %s109, 1
      %s111 = scalar_select %p108, %s109, %s110
      %p114 = pneg %p108
      %p115 = scmp.eq.s32.totalorder %s12, 3
      %p116 = por %p114, %p115
      %p117 = scmp.ne.s32.totalorder %s109, %s112
      %p118 = scmp.eq.s32.totalorder %s12, 0
      %p119 = por %p117, %p118
      %p120 = scmp.ne.s32.totalorder %s109, %s112
      %p121 = scmp.eq.s32.totalorder %s17, 3
      %p122 = por %p120, %p121
      %p123 = scmp.ne.s32.totalorder %s112, %s113
      %p124 = scmp.eq.s32.totalorder %s17, 0
      %p125 = por %p123, %p124
      %p126 = scmp.ne.s32.totalorder %s112, %s113
      %p127 = scmp.eq.s32.totalorder %s18, 3
      %p128 = por %p126, %p127
      %p130 = scmp.ne.s32.totalorder %s113, %s129
      %p131 = scmp.eq.s32.totalorder %s18, 0
      %p132 = por %p130, %p131
      %p133 = scmp.le.s32.totalorder 1, %s12
      %p134 = scmp.lt.s32.totalorder %s12, 5
      %p135 = pnand %p133, %p134
      %p136 = pneg %p135
      // Predicated region
      $region9: #{tpu_custom_call.1} parent=5 // pred_check
        _
      $region10: #{tpu_custom_call.1} parent=5 // pred_check_branch
        %138 = sbr.rel (%p135) target = $region12
      $region11: #{tpu_custom_call.1} parent=5 // pred_region
        %s139 = ssub.s32 %s12, 1
        // Predicated region
        $region13: #{tpu_custom_call.1} parent=11 // pred_check
          %p140 = pneg %p45
        $region14: #{tpu_custom_call.1} parent=11 // pred_check_branch
          %142 = sbr.rel (%p140) target = $region16
        $region15: #{tpu_custom_call.1} parent=11 // pred_region
          _
        $region16: #{tpu_custom_call.1} parent=11 // pred_fallthru
          _
      $region12: #{tpu_custom_call.1} parent=5 // pred_fallthru
        _
      %p143 = scmp.lt.s32.totalorder %s12, 4
      // Predicated region
      $region17: #{tpu_custom_call.1} parent=5 // pred_check
        %p144 = pneg %p143
      $region18: #{tpu_custom_call.1} parent=5 // pred_check_branch
        %146 = sbr.rel (%p144) target = $region20
      $region19: #{tpu_custom_call.1} parent=5 // pred_region
        // Predicated region
        $region21: #{tpu_custom_call.1} parent=19 // pred_check
          %p147 = pneg %p65
        $region22: #{tpu_custom_call.1} parent=19 // pred_check_branch
          %149 = sbr.rel (%p147) target = $region24
        $region23: #{tpu_custom_call.1} parent=19 // pred_region
          %s150 = smul.u32 2, %s19
          %p151 = scmp.lt.s32.totalorder %s150, 3
          %s152 = scalar_select %p151, %s150, 3
          %s153 = smul.addr %s152, 4
          %s154 = scalar_lea.vmem %s1, %s153
          %s155 = smul.u32 2, %s19
        $region24: #{tpu_custom_call.1} parent=19 // pred_fallthru
          _
        // Predicated region
        $region25: #{tpu_custom_call.1} parent=19 // pred_check
          %p156 = pneg %p91
        $region26: #{tpu_custom_call.1} parent=19 // pred_check_branch
          %158 = sbr.rel (%p156) target = $region28
        $region27: #{tpu_custom_call.1} parent=19 // pred_region
          %s159 = smul.u32 2, %s19
          %p160 = scmp.lt.s32.totalorder %s159, 3
          %s161 = scalar_select %p160, %s159, 3
          %s162 = scalar_lea.vmem %s2, %s161
          %s163 = smul.u32 2, %s19
        $region28: #{tpu_custom_call.1} parent=19 // pred_fallthru
          _
      $region20: #{tpu_custom_call.1} parent=5 // pred_fallthru
        _
      %p164 = scmp.le.s32.totalorder 1, %s12
      %p165 = scmp.lt.s32.totalorder %s12, 5
      %p166 = pnand %p164, %p165
      %p167 = pneg %p166
      // Predicated region
      $region29: #{tpu_custom_call.1} parent=5 // pred_check
        _
      $region30: #{tpu_custom_call.1} parent=5 // pred_check_branch
        %169 = sbr.rel (%p166) target = $region32
      $region31: #{tpu_custom_call.1} parent=5 // pred_region
        %s170 = ssub.s32 %s12, 1
        %p171 = pneg %p45
        %p172 = pneg %p42
        %s173 = smul.u32 2, %s21
        %p174 = scmp.lt.s32.totalorder %s173, 3
        %s175 = scalar_select %p174, %s173, 3
        %s176 = smul.addr %s175, 4
        %s177 = scalar_lea.vmem %s1, %s176
        %p178 = pneg %p71
        %p179 = pneg %p68
        %s180 = smul.u32 2, %s21
        %p181 = scmp.lt.s32.totalorder %s180, 3
        %s182 = scalar_select %p181, %s180, 3
        %s183 = scalar_lea.vmem %s2, %s182
        %p184 = pneg %p97
        %p185 = pneg %p94
        %p186 = pneg %p125
        %p187 = pneg %p122
        %s188 = sand.u32 %s112, 1
        %s189 = scalar_lea.sflag [#allocation3], %s188
        %s190 = sand.u32 %s112, 1
        %s191 = smul.addr %s190, 512
        %s192 = scalar_lea.vmem [#allocation2], %s191
        %s193 = smul.u32 2, %s21
        %p194 = scmp.lt.s32.totalorder %s193, 3
        %s195 = scalar_select %p194, %s193, 3
        %s196 = smul.addr %s195, 4
        %s197 = scalar_lea.vmem %s1, %s196
        %s198 = smul.u32 2, %s21
        %s199 = smul.u32 2, %s21
        %p200 = scmp.lt.s32.totalorder %s199, 3
        %s201 = scalar_select %p200, %s199, 3
        %s202 = scalar_lea.vmem %s2, %s201
        %s203 = smul.u32 2, %s21
        %s204 = smul.u32 2, %s22
        %s205 = smul.u32 2, %s21
        %s207 = smul.u32 %s22, 2
        %s208 = smul.u32 %s207, 32
        %s209 = smul.addr %s208, 4
        %s210 = scalar_lea.vmem %s0, %s209
        %v211 = vld [vmem:[%s210] sm:$0xf]
        %v212 = vld [vmem:[%s210 + $0x4] sm:$0xf]
        %v213 = vld [vmem:[%s210 + $0x8] sm:$0xf]
        %v214 = vld [vmem:[%s210 + $0xc] sm:$0xf]
        %v215 = vld [vmem:[%s210 + $0x10] sm:$0xf]
        %v216 = vld [vmem:[%s210 + $0x14] sm:$0xf]
        %v217 = vld [vmem:[%s210 + $0x18] sm:$0xf]
        %v218 = vld [vmem:[%s210 + $0x1c] sm:$0xf]
        %v219 = vld [vmem:[%s210 + $0x20] sm:$0xf]
        %v220 = vld [vmem:[%s210 + $0x24] sm:$0xf]
        %v221 = vld [vmem:[%s210 + $0x28] sm:$0xf]
        %v222 = vld [vmem:[%s210 + $0x2c] sm:$0xf]
        %v223 = vld [vmem:[%s210 + $0x30] sm:$0xf]
        %v224 = vld [vmem:[%s210 + $0x34] sm:$0xf]
        %v225 = vld [vmem:[%s210 + $0x38] sm:$0xf]
        %v226 = vld [vmem:[%s210 + $0x3c] sm:$0xf]
        %v227 = vld [vmem:[%s210 + $0x40] sm:$0xf]
        %v228 = vld [vmem:[%s210 + $0x44] sm:$0xf]
        %v229 = vld [vmem:[%s210 + $0x48] sm:$0xf]
        %v230 = vld [vmem:[%s210 + $0x4c] sm:$0xf]
        %v231 = vld [vmem:[%s210 + $0x50] sm:$0xf]
        %v232 = vld [vmem:[%s210 + $0x54] sm:$0xf]
        %v233 = vld [vmem:[%s210 + $0x58] sm:$0xf]
        %v234 = vld [vmem:[%s210 + $0x5c] sm:$0xf]
        %v235 = vld [vmem:[%s210 + $0x60] sm:$0xf]
        %v236 = vld [vmem:[%s210 + $0x64] sm:$0xf]
        %v237 = vld [vmem:[%s210 + $0x68] sm:$0xf]
        %v238 = vld [vmem:[%s210 + $0x6c] sm:$0xf]
        %v239 = vld [vmem:[%s210 + $0x70] sm:$0xf]
        %v240 = vld [vmem:[%s210 + $0x74] sm:$0xf]
        %v241 = vld [vmem:[%s210 + $0x78] sm:$0xf]
        %v242 = vld [vmem:[%s210 + $0x7c] sm:$0xf]
        %v243 = vld [vmem:[%s210 + $0x80] sm:$0xf]
        %v244 = vld [vmem:[%s210 + $0x84] sm:$0xf]
        %v245 = vld [vmem:[%s210 + $0x88] sm:$0xf]
        %v246 = vld [vmem:[%s210 + $0x8c] sm:$0xf]
        %v247 = vld [vmem:[%s210 + $0x90] sm:$0xf]
        %v248 = vld [vmem:[%s210 + $0x94] sm:$0xf]
        %v249 = vld [vmem:[%s210 + $0x98] sm:$0xf]
        %v250 = vld [vmem:[%s210 + $0x9c] sm:$0xf]
        %v251 = vld [vmem:[%s210 + $0xa0] sm:$0xf]
        %v252 = vld [vmem:[%s210 + $0xa4] sm:$0xf]
        %v253 = vld [vmem:[%s210 + $0xa8] sm:$0xf]
        %v254 = vld [vmem:[%s210 + $0xac] sm:$0xf]
        %v255 = vld [vmem:[%s210 + $0xb0] sm:$0xf]
        %v256 = vld [vmem:[%s210 + $0xb4] sm:$0xf]
        %v257 = vld [vmem:[%s210 + $0xb8] sm:$0xf]
        %v258 = vld [vmem:[%s210 + $0xbc] sm:$0xf]
        %v259 = vld [vmem:[%s210 + $0xc0] sm:$0xf]
        %v260 = vld [vmem:[%s210 + $0xc4] sm:$0xf]
        %v261 = vld [vmem:[%s210 + $0xc8] sm:$0xf]
        %v262 = vld [vmem:[%s210 + $0xcc] sm:$0xf]
        %v263 = vld [vmem:[%s210 + $0xd0] sm:$0xf]
        %v264 = vld [vmem:[%s210 + $0xd4] sm:$0xf]
        %v265 = vld [vmem:[%s210 + $0xd8] sm:$0xf]
        %v266 = vld [vmem:[%s210 + $0xdc] sm:$0xf]
        %v267 = vld [vmem:[%s210 + $0xe0] sm:$0xf]
        %v268 = vld [vmem:[%s210 + $0xe4] sm:$0xf]
        %v269 = vld [vmem:[%s210 + $0xe8] sm:$0xf]
        %v270 = vld [vmem:[%s210 + $0xec] sm:$0xf]
        %v271 = vld [vmem:[%s210 + $0xf0] sm:$0xf]
        %v272 = vld [vmem:[%s210 + $0xf4] sm:$0xf]
        %v273 = vld [vmem:[%s210 + $0xf8] sm:$0xf]
        %v274 = vld [vmem:[%s210 + $0xfc] sm:$0xf]
        %v275 = vld [vmem:[%s197] sm:$0xff]
        %v276 = vld [vmem:[%s202] sm:$0x3]
        %v278 = vperm.slane %v276, 0
        %v279 = vperm.slane %v276, 1
        %v346 = vunpack.c.l.b16 %v211
        %v347 = vunpack.c.l.b16 %v212
        %v348 = vunpack.c.l.b16 %v213
        %v349 = vunpack.c.l.b16 %v214
        %v350 = vunpack.c.l.b16 %v215
        %v351 = vunpack.c.l.b16 %v216
        %v352 = vunpack.c.l.b16 %v217
        %v353 = vunpack.c.l.b16 %v218
        %v354 = vunpack.c.l.b16 %v219
        %v355 = vunpack.c.l.b16 %v220
        %v356 = vunpack.c.l.b16 %v221
        %v357 = vunpack.c.l.b16 %v222
        %v358 = vunpack.c.l.b16 %v223
        %v359 = vunpack.c.l.b16 %v224
        %v360 = vunpack.c.l.b16 %v225
        %v361 = vunpack.c.l.b16 %v226
        %v362 = vunpack.c.l.b16 %v227
        %v363 = vunpack.c.l.b16 %v228
        %v364 = vunpack.c.l.b16 %v229
        %v365 = vunpack.c.l.b16 %v230
        %v366 = vunpack.c.l.b16 %v231
        %v367 = vunpack.c.l.b16 %v232
        %v368 = vunpack.c.l.b16 %v233
        %v369 = vunpack.c.l.b16 %v234
        %v370 = vunpack.c.l.b16 %v235
        %v371 = vunpack.c.l.b16 %v236
        %v372 = vunpack.c.l.b16 %v237
        %v373 = vunpack.c.l.b16 %v238
        %v374 = vunpack.c.l.b16 %v239
        %v375 = vunpack.c.l.b16 %v240
        %v376 = vunpack.c.l.b16 %v241
        %v377 = vunpack.c.l.b16 %v242
        %v378 = vunpack.c.l.b16 %v243
        %v379 = vunpack.c.l.b16 %v244
        %v380 = vunpack.c.l.b16 %v245
        %v381 = vunpack.c.l.b16 %v246
        %v382 = vunpack.c.l.b16 %v247
        %v383 = vunpack.c.l.b16 %v248
        %v384 = vunpack.c.l.b16 %v249
        %v385 = vunpack.c.l.b16 %v250
        %v386 = vunpack.c.l.b16 %v251
        %v387 = vunpack.c.l.b16 %v252
        %v388 = vunpack.c.l.b16 %v253
        %v389 = vunpack.c.l.b16 %v254
        %v390 = vunpack.c.l.b16 %v255
        %v391 = vunpack.c.l.b16 %v256
        %v392 = vunpack.c.l.b16 %v257
        %v393 = vunpack.c.l.b16 %v258
        %v394 = vunpack.c.l.b16 %v259
        %v395 = vunpack.c.l.b16 %v260
        %v396 = vunpack.c.l.b16 %v261
        %v397 = vunpack.c.l.b16 %v262
        %v398 = vunpack.c.l.b16 %v263
        %v399 = vunpack.c.l.b16 %v264
        %v400 = vunpack.c.l.b16 %v265
        %v401 = vunpack.c.l.b16 %v266
        %v402 = vunpack.c.l.b16 %v267
        %v403 = vunpack.c.l.b16 %v268
        %v404 = vunpack.c.l.b16 %v269
        %v405 = vunpack.c.l.b16 %v270
        %v406 = vunpack.c.l.b16 %v271
        %v407 = vunpack.c.l.b16 %v272
        %v408 = vunpack.c.l.b16 %v273
        %v409 = vunpack.c.l.b16 %v274
        %v410 = vpack.c.b16 %v347, %v346
        %v411 = vpack.c.b16 %v349, %v348
        %v412 = vpack.c.b16 %v351, %v350
        %v413 = vpack.c.b16 %v353, %v352
        %v414 = vpack.c.b16 %v355, %v354
        %v415 = vpack.c.b16 %v357, %v356
        %v416 = vpack.c.b16 %v359, %v358
        %v417 = vpack.c.b16 %v361, %v360
        %v418 = vpack.c.b16 %v363, %v362
        %v419 = vpack.c.b16 %v365, %v364
        %v420 = vpack.c.b16 %v367, %v366
        %v421 = vpack.c.b16 %v369, %v368
        %v422 = vpack.c.b16 %v371, %v370
        %v423 = vpack.c.b16 %v373, %v372
        %v424 = vpack.c.b16 %v375, %v374
        %v425 = vpack.c.b16 %v377, %v376
        %v426 = vpack.c.b16 %v379, %v378
        %v427 = vpack.c.b16 %v381, %v380
        %v428 = vpack.c.b16 %v383, %v382
        %v429 = vpack.c.b16 %v385, %v384
        %v430 = vpack.c.b16 %v387, %v386
        %v431 = vpack.c.b16 %v389, %v388
        %v432 = vpack.c.b16 %v391, %v390
        %v433 = vpack.c.b16 %v393, %v392
        %v434 = vpack.c.b16 %v395, %v394
        %v435 = vpack.c.b16 %v397, %v396
        %v436 = vpack.c.b16 %v399, %v398
        %v437 = vpack.c.b16 %v401, %v400
        %v438 = vpack.c.b16 %v403, %v402
        %v439 = vpack.c.b16 %v405, %v404
        %v440 = vpack.c.b16 %v407, %v406
        %v441 = vpack.c.b16 %v409, %v408
        %v443 = vunpack.c.l.b16 %v275
        %v444 = vunpack.c.h.b16 %v275
        %v445 = vpack.c.b16 %v443, %v443
        %v446 = vpack.c.b16 %v444, %v444
        %vm447 = vcmask 64512
        %v449 = vsel %vm447, %v410, 0
        %v452 = vsel %vm447, %v411, 0
        %v455 = vsel %vm447, %v412, 0
        %v458 = vsel %vm447, %v413, 0
        %v461 = vsel %vm447, %v414, 0
        %v464 = vsel %vm447, %v415, 0
        %v467 = vsel %vm447, %v416, 0
        %v470 = vsel %vm447, %v417, 0
        %v473 = vsel %vm447, %v418, 0
        %v476 = vsel %vm447, %v419, 0
        %v479 = vsel %vm447, %v420, 0
        %v482 = vsel %vm447, %v421, 0
        %v485 = vsel %vm447, %v422, 0
        %v488 = vsel %vm447, %v423, 0
        %v491 = vsel %vm447, %v424, 0
        %v494 = vsel %vm447, %v425, 0
        %v497 = vsel %vm447, %v426, 0
        %v500 = vsel %vm447, %v427, 0
        %v503 = vsel %vm447, %v428, 0
        %v506 = vsel %vm447, %v429, 0
        %v509 = vsel %vm447, %v430, 0
        %v512 = vsel %vm447, %v431, 0
        %v515 = vsel %vm447, %v432, 0
        %v518 = vsel %vm447, %v433, 0
        %v521 = vsel %vm447, %v434, 0
        %v524 = vsel %vm447, %v435, 0
        %v527 = vsel %vm447, %v436, 0
        %v530 = vsel %vm447, %v437, 0
        %v533 = vsel %vm447, %v438, 0
        %v536 = vsel %vm447, %v439, 0
        %v539 = vsel %vm447, %v440, 0
        %v542 = vsel %vm447, %v441, 0
        %vm544 = vcmask 1043456
        %v546 = vsel %vm544, %v445, 0
        %v549 = vsel %vm544, %v446, 0
        %551 = vmatpush.bf16.msra.mxu0 0
        %552 = vmatpush.bf16.msra.mxu0 0
        %553 = vmatpush.bf16.msra.mxu0 0
        %554 = vmatpush.bf16.msra.mxu0 0
        %555 = vmatpush.bf16.msra.mxu0 0
        %556 = vmatpush.bf16.msra.mxu0 0
        %557 = vmatpush.bf16.msra.mxu0 0
        %558 = vmatpush.bf16.msra.mxu0 %v546
        %559 = vmatmul.bf16.gmra.mxu0 %v449
        %v560 = vpop.f32.mrf.mxu0
        %v561 = vadd.f32 %v278, %v560
        %v562 = vpop.f32.mrf.mxu0
        %v563 = vadd.f32 %v278, %v562
        %564 = vmatmul.bf16.gmra.mxu0 %v452
        %v565 = vpop.f32.mrf.mxu0
        %v566 = vadd.f32 %v278, %v565
        %v567 = vpop.f32.mrf.mxu0
        %v568 = vadd.f32 %v278, %v567
        %569 = vmatmul.bf16.gmra.mxu0 %v455
        %v570 = vpop.f32.mrf.mxu0
        %v571 = vadd.f32 %v278, %v570
        %v572 = vpop.f32.mrf.mxu0
        %v573 = vadd.f32 %v278, %v572
        %574 = vmatmul.bf16.gmra.mxu0 %v458
        %v575 = vpop.f32.mrf.mxu0
        %v576 = vadd.f32 %v278, %v575
        %v577 = vpop.f32.mrf.mxu0
        %v578 = vadd.f32 %v278, %v577
        %579 = vmatmul.bf16.gmra.mxu0 %v461
        %v580 = vpop.f32.mrf.mxu0
        %v581 = vadd.f32 %v278, %v580
        %v582 = vpop.f32.mrf.mxu0
        %v583 = vadd.f32 %v278, %v582
        %584 = vmatmul.bf16.gmra.mxu0 %v464
        %v585 = vpop.f32.mrf.mxu0
        %v586 = vadd.f32 %v278, %v585
        %v587 = vpop.f32.mrf.mxu0
        %v588 = vadd.f32 %v278, %v587
        %589 = vmatmul.bf16.gmra.mxu0 %v467
        %v590 = vpop.f32.mrf.mxu0
        %v591 = vadd.f32 %v278, %v590
        %v592 = vpop.f32.mrf.mxu0
        %v593 = vadd.f32 %v278, %v592
        %594 = vmatmul.bf16.gmra.mxu0 %v470
        %v595 = vpop.f32.mrf.mxu0
        %v596 = vadd.f32 %v278, %v595
        %v597 = vpop.f32.mrf.mxu0
        %v598 = vadd.f32 %v278, %v597
        %599 = vmatmul.bf16.gmra.mxu0 %v473
        %v600 = vpop.f32.mrf.mxu0
        %v601 = vadd.f32 %v278, %v600
        %v602 = vpop.f32.mrf.mxu0
        %v603 = vadd.f32 %v278, %v602
        %604 = vmatmul.bf16.gmra.mxu0 %v476
        %v605 = vpop.f32.mrf.mxu0
        %v606 = vadd.f32 %v278, %v605
        %v607 = vpop.f32.mrf.mxu0
        %v608 = vadd.f32 %v278, %v607
        %609 = vmatmul.bf16.gmra.mxu0 %v479
        %v610 = vpop.f32.mrf.mxu0
        %v611 = vadd.f32 %v278, %v610
        %v612 = vpop.f32.mrf.mxu0
        %v613 = vadd.f32 %v278, %v612
        %614 = vmatmul.bf16.gmra.mxu0 %v482
        %v615 = vpop.f32.mrf.mxu0
        %v616 = vadd.f32 %v278, %v615
        %v617 = vpop.f32.mrf.mxu0
        %v618 = vadd.f32 %v278, %v617
        %619 = vmatmul.bf16.gmra.mxu0 %v485
        %v620 = vpop.f32.mrf.mxu0
        %v621 = vadd.f32 %v278, %v620
        %v622 = vpop.f32.mrf.mxu0
        %v623 = vadd.f32 %v278, %v622
        %624 = vmatmul.bf16.gmra.mxu0 %v488
        %v625 = vpop.f32.mrf.mxu0
        %v626 = vadd.f32 %v278, %v625
        %v627 = vpop.f32.mrf.mxu0
        %v628 = vadd.f32 %v278, %v627
        %629 = vmatmul.bf16.gmra.mxu0 %v491
        %v630 = vpop.f32.mrf.mxu0
        %v631 = vadd.f32 %v278, %v630
        %v632 = vpop.f32.mrf.mxu0
        %v633 = vadd.f32 %v278, %v632
        %634 = vmatmul.bf16.gmra.mxu0 %v494
        %v635 = vpop.f32.mrf.mxu0
        %v636 = vadd.f32 %v278, %v635
        %v637 = vpop.f32.mrf.mxu0
        %v638 = vadd.f32 %v278, %v637
        %639 = vmatmul.bf16.gmra.mxu0 %v497
        %v640 = vpop.f32.mrf.mxu0
        %v641 = vadd.f32 %v278, %v640
        %v642 = vpop.f32.mrf.mxu0
        %v643 = vadd.f32 %v278, %v642
        %644 = vmatmul.bf16.gmra.mxu0 %v500
        %v645 = vpop.f32.mrf.mxu0
        %v646 = vadd.f32 %v278, %v645
        %v647 = vpop.f32.mrf.mxu0
        %v648 = vadd.f32 %v278, %v647
        %649 = vmatmul.bf16.gmra.mxu0 %v503
        %v650 = vpop.f32.mrf.mxu0
        %v651 = vadd.f32 %v278, %v650
        %v652 = vpop.f32.mrf.mxu0
        %v653 = vadd.f32 %v278, %v652
        %654 = vmatmul.bf16.gmra.mxu0 %v506
        %v655 = vpop.f32.mrf.mxu0
        %v656 = vadd.f32 %v278, %v655
        %v657 = vpop.f32.mrf.mxu0
        %v658 = vadd.f32 %v278, %v657
        %659 = vmatmul.bf16.gmra.mxu0 %v509
        %v660 = vpop.f32.mrf.mxu0
        %v661 = vadd.f32 %v278, %v660
        %v662 = vpop.f32.mrf.mxu0
        %v663 = vadd.f32 %v278, %v662
        %664 = vmatmul.bf16.gmra.mxu0 %v512
        %v665 = vpop.f32.mrf.mxu0
        %v666 = vadd.f32 %v278, %v665
        %v667 = vpop.f32.mrf.mxu0
        %v668 = vadd.f32 %v278, %v667
        %669 = vmatmul.bf16.gmra.mxu0 %v515
        %v670 = vpop.f32.mrf.mxu0
        %v671 = vadd.f32 %v278, %v670
        %v672 = vpop.f32.mrf.mxu0
        %v673 = vadd.f32 %v278, %v672
        %674 = vmatmul.bf16.gmra.mxu0 %v518
        %v675 = vpop.f32.mrf.mxu0
        %v676 = vadd.f32 %v278, %v675
        %v677 = vpop.f32.mrf.mxu0
        %v678 = vadd.f32 %v278, %v677
        %679 = vmatmul.bf16.gmra.mxu0 %v521
        %v680 = vpop.f32.mrf.mxu0
        %v681 = vadd.f32 %v278, %v680
        %v682 = vpop.f32.mrf.mxu0
        %v683 = vadd.f32 %v278, %v682
        %684 = vmatmul.bf16.gmra.mxu0 %v524
        %v685 = vpop.f32.mrf.mxu0
        %v686 = vadd.f32 %v278, %v685
        %v687 = vpop.f32.mrf.mxu0
        %v688 = vadd.f32 %v278, %v687
        %689 = vmatmul.bf16.gmra.mxu0 %v527
        %v690 = vpop.f32.mrf.mxu0
        %v691 = vadd.f32 %v278, %v690
        %v692 = vpop.f32.mrf.mxu0
        %v693 = vadd.f32 %v278, %v692
        %694 = vmatmul.bf16.gmra.mxu0 %v530
        %v695 = vpop.f32.mrf.mxu0
        %v696 = vadd.f32 %v278, %v695
        %v697 = vpop.f32.mrf.mxu0
        %v698 = vadd.f32 %v278, %v697
        %699 = vmatmul.bf16.gmra.mxu0 %v533
        %v700 = vpop.f32.mrf.mxu0
        %v701 = vadd.f32 %v278, %v700
        %v702 = vpop.f32.mrf.mxu0
        %v703 = vadd.f32 %v278, %v702
        %704 = vmatmul.bf16.gmra.mxu0 %v536
        %v705 = vpop.f32.mrf.mxu0
        %v706 = vadd.f32 %v278, %v705
        %v707 = vpop.f32.mrf.mxu0
        %v708 = vadd.f32 %v278, %v707
        %709 = vmatmul.bf16.gmra.mxu0 %v539
        %v710 = vpop.f32.mrf.mxu0
        %v711 = vadd.f32 %v278, %v710
        %v712 = vpop.f32.mrf.mxu0
        %v713 = vadd.f32 %v278, %v712
        %714 = vmatmul.bf16.gmra.mxu0 %v542
        %v715 = vpop.f32.mrf.mxu0
        %v716 = vadd.f32 %v278, %v715
        %v717 = vpop.f32.mrf.mxu0
        %v718 = vadd.f32 %v278, %v717
        %719 = vdwg.mxu0
        %720 = vmatpush.bf16.msra.mxu0 0
        %721 = vmatpush.bf16.msra.mxu0 0
        %722 = vmatpush.bf16.msra.mxu0 0
        %723 = vmatpush.bf16.msra.mxu0 0
        %724 = vmatpush.bf16.msra.mxu0 0
        %725 = vmatpush.bf16.msra.mxu0 0
        %726 = vmatpush.bf16.msra.mxu0 0
        %727 = vmatpush.bf16.msra.mxu0 %v549
        %728 = vmatmul.bf16.gmra.mxu0 %v449
        %v729 = vpop.f32.mrf.mxu0
        %v730 = vadd.f32 %v279, %v729
        %v731 = vpop.f32.mrf.mxu0
        %v732 = vadd.f32 %v279, %v731
        %733 = vmatmul.bf16.gmra.mxu0 %v452
        %v734 = vpop.f32.mrf.mxu0
        %v735 = vadd.f32 %v279, %v734
        %v736 = vpop.f32.mrf.mxu0
        %v737 = vadd.f32 %v279, %v736
        %738 = vmatmul.bf16.gmra.mxu0 %v455
        %v739 = vpop.f32.mrf.mxu0
        %v740 = vadd.f32 %v279, %v739
        %v741 = vpop.f32.mrf.mxu0
        %v742 = vadd.f32 %v279, %v741
        %743 = vmatmul.bf16.gmra.mxu0 %v458
        %v744 = vpop.f32.mrf.mxu0
        %v745 = vadd.f32 %v279, %v744
        %v746 = vpop.f32.mrf.mxu0
        %v747 = vadd.f32 %v279, %v746
        %748 = vmatmul.bf16.gmra.mxu0 %v461
        %v749 = vpop.f32.mrf.mxu0
        %v750 = vadd.f32 %v279, %v749
        %v751 = vpop.f32.mrf.mxu0
        %v752 = vadd.f32 %v279, %v751
        %753 = vmatmul.bf16.gmra.mxu0 %v464
        %v754 = vpop.f32.mrf.mxu0
        %v755 = vadd.f32 %v279, %v754
        %v756 = vpop.f32.mrf.mxu0
        %v757 = vadd.f32 %v279, %v756
        %758 = vmatmul.bf16.gmra.mxu0 %v467
        %v759 = vpop.f32.mrf.mxu0
        %v760 = vadd.f32 %v279, %v759
        %v761 = vpop.f32.mrf.mxu0
        %v762 = vadd.f32 %v279, %v761
        %763 = vmatmul.bf16.gmra.mxu0 %v470
        %v764 = vpop.f32.mrf.mxu0
        %v765 = vadd.f32 %v279, %v764
        %v766 = vpop.f32.mrf.mxu0
        %v767 = vadd.f32 %v279, %v766
        %768 = vmatmul.bf16.gmra.mxu0 %v473
        %v769 = vpop.f32.mrf.mxu0
        %v770 = vadd.f32 %v279, %v769
        %v771 = vpop.f32.mrf.mxu0
        %v772 = vadd.f32 %v279, %v771
        %773 = vmatmul.bf16.gmra.mxu0 %v476
        %v774 = vpop.f32.mrf.mxu0
        %v775 = vadd.f32 %v279, %v774
        %v776 = vpop.f32.mrf.mxu0
        %v777 = vadd.f32 %v279, %v776
        %778 = vmatmul.bf16.gmra.mxu0 %v479
        %v779 = vpop.f32.mrf.mxu0
        %v780 = vadd.f32 %v279, %v779
        %v781 = vpop.f32.mrf.mxu0
        %v782 = vadd.f32 %v279, %v781
        %783 = vmatmul.bf16.gmra.mxu0 %v482
        %v784 = vpop.f32.mrf.mxu0
        %v785 = vadd.f32 %v279, %v784
        %v786 = vpop.f32.mrf.mxu0
        %v787 = vadd.f32 %v279, %v786
        %788 = vmatmul.bf16.gmra.mxu0 %v485
        %v789 = vpop.f32.mrf.mxu0
        %v790 = vadd.f32 %v279, %v789
        %v791 = vpop.f32.mrf.mxu0
        %v792 = vadd.f32 %v279, %v791
        %793 = vmatmul.bf16.gmra.mxu0 %v488
        %v794 = vpop.f32.mrf.mxu0
        %v795 = vadd.f32 %v279, %v794
        %v796 = vpop.f32.mrf.mxu0
        %v797 = vadd.f32 %v279, %v796
        %798 = vmatmul.bf16.gmra.mxu0 %v491
        %v799 = vpop.f32.mrf.mxu0
        %v800 = vadd.f32 %v279, %v799
        %v801 = vpop.f32.mrf.mxu0
        %v802 = vadd.f32 %v279, %v801
        %803 = vmatmul.bf16.gmra.mxu0 %v494
        %v804 = vpop.f32.mrf.mxu0
        %v805 = vadd.f32 %v279, %v804
        %v806 = vpop.f32.mrf.mxu0
        %v807 = vadd.f32 %v279, %v806
        %808 = vmatmul.bf16.gmra.mxu0 %v497
        %v809 = vpop.f32.mrf.mxu0
        %v810 = vadd.f32 %v279, %v809
        %v811 = vpop.f32.mrf.mxu0
        %v812 = vadd.f32 %v279, %v811
        %813 = vmatmul.bf16.gmra.mxu0 %v500
        %v814 = vpop.f32.mrf.mxu0
        %v815 = vadd.f32 %v279, %v814
        %v816 = vpop.f32.mrf.mxu0
        %v817 = vadd.f32 %v279, %v816
        %818 = vmatmul.bf16.gmra.mxu0 %v503
        %v819 = vpop.f32.mrf.mxu0
        %v820 = vadd.f32 %v279, %v819
        %v821 = vpop.f32.mrf.mxu0
        %v822 = vadd.f32 %v279, %v821
        %823 = vmatmul.bf16.gmra.mxu0 %v506
        %v824 = vpop.f32.mrf.mxu0
        %v825 = vadd.f32 %v279, %v824
        %v826 = vpop.f32.mrf.mxu0
        %v827 = vadd.f32 %v279, %v826
        %828 = vmatmul.bf16.gmra.mxu0 %v509
        %v829 = vpop.f32.mrf.mxu0
        %v830 = vadd.f32 %v279, %v829
        %v831 = vpop.f32.mrf.mxu0
        %v832 = vadd.f32 %v279, %v831
        %833 = vmatmul.bf16.gmra.mxu0 %v512
        %v834 = vpop.f32.mrf.mxu0
        %v835 = vadd.f32 %v279, %v834
        %v836 = vpop.f32.mrf.mxu0
        %v837 = vadd.f32 %v279, %v836
        %838 = vmatmul.bf16.gmra.mxu0 %v515
        %v839 = vpop.f32.mrf.mxu0
        %v840 = vadd.f32 %v279, %v839
        %v841 = vpop.f32.mrf.mxu0
        %v842 = vadd.f32 %v279, %v841
        %843 = vmatmul.bf16.gmra.mxu0 %v518
        %v844 = vpop.f32.mrf.mxu0
        %v845 = vadd.f32 %v279, %v844
        %v846 = vpop.f32.mrf.mxu0
        %v847 = vadd.f32 %v279, %v846
        %848 = vmatmul.bf16.gmra.mxu0 %v521
        %v849 = vpop.f32.mrf.mxu0
        %v850 = vadd.f32 %v279, %v849
        %v851 = vpop.f32.mrf.mxu0
        %v852 = vadd.f32 %v279, %v851
        %853 = vmatmul.bf16.gmra.mxu0 %v524
        %v854 = vpop.f32.mrf.mxu0
        %v855 = vadd.f32 %v279, %v854
        %v856 = vpop.f32.mrf.mxu0
        %v857 = vadd.f32 %v279, %v856
        %858 = vmatmul.bf16.gmra.mxu0 %v527
        %v859 = vpop.f32.mrf.mxu0
        %v860 = vadd.f32 %v279, %v859
        %v861 = vpop.f32.mrf.mxu0
        %v862 = vadd.f32 %v279, %v861
        %863 = vmatmul.bf16.gmra.mxu0 %v530
        %v864 = vpop.f32.mrf.mxu0
        %v865 = vadd.f32 %v279, %v864
        %v866 = vpop.f32.mrf.mxu0
        %v867 = vadd.f32 %v279, %v866
        %868 = vmatmul.bf16.gmra.mxu0 %v533
        %v869 = vpop.f32.mrf.mxu0
        %v870 = vadd.f32 %v279, %v869
        %v871 = vpop.f32.mrf.mxu0
        %v872 = vadd.f32 %v279, %v871
        %873 = vmatmul.bf16.gmra.mxu0 %v536
        %v874 = vpop.f32.mrf.mxu0
        %v875 = vadd.f32 %v279, %v874
        %v876 = vpop.f32.mrf.mxu0
        %v877 = vadd.f32 %v279, %v876
        %878 = vmatmul.bf16.gmra.mxu0 %v539
        %v879 = vpop.f32.mrf.mxu0
        %v880 = vadd.f32 %v279, %v879
        %v881 = vpop.f32.mrf.mxu0
        %v882 = vadd.f32 %v279, %v881
        %883 = vmatmul.bf16.gmra.mxu0 %v542
        %v884 = vpop.f32.mrf.mxu0
        %v885 = vadd.f32 %v279, %v884
        %v886 = vpop.f32.mrf.mxu0
        %v887 = vadd.f32 %v279, %v886
        %888 = vdwg.mxu0
        %vm889 = vcmp.ge.f32.partialorder %v561, 0.0
        %vm890 = vcmp.ge.f32.partialorder %v730, 0.0
        %vm891 = vcmp.ge.f32.partialorder %v563, 0.0
        %vm892 = vcmp.ge.f32.partialorder %v732, 0.0
        %vm893 = vcmp.ge.f32.partialorder %v566, 0.0
        %vm894 = vcmp.ge.f32.partialorder %v735, 0.0
        %vm895 = vcmp.ge.f32.partialorder %v568, 0.0
        %vm896 = vcmp.ge.f32.partialorder %v737, 0.0
        %vm897 = vcmp.ge.f32.partialorder %v571, 0.0
        %vm898 = vcmp.ge.f32.partialorder %v740, 0.0
        %vm899 = vcmp.ge.f32.partialorder %v573, 0.0
        %vm900 = vcmp.ge.f32.partialorder %v742, 0.0
        %vm901 = vcmp.ge.f32.partialorder %v576, 0.0
        %vm902 = vcmp.ge.f32.partialorder %v745, 0.0
        %vm903 = vcmp.ge.f32.partialorder %v578, 0.0
        %vm904 = vcmp.ge.f32.partialorder %v747, 0.0
        %vm905 = vcmp.ge.f32.partialorder %v581, 0.0
        %vm906 = vcmp.ge.f32.partialorder %v750, 0.0
        %vm907 = vcmp.ge.f32.partialorder %v583, 0.0
        %vm908 = vcmp.ge.f32.partialorder %v752, 0.0
        %vm909 = vcmp.ge.f32.partialorder %v586, 0.0
        %vm910 = vcmp.ge.f32.partialorder %v755, 0.0
        %vm911 = vcmp.ge.f32.partialorder %v588, 0.0
        %vm912 = vcmp.ge.f32.partialorder %v757, 0.0
        %vm913 = vcmp.ge.f32.partialorder %v591, 0.0
        %vm914 = vcmp.ge.f32.partialorder %v760, 0.0
        %vm915 = vcmp.ge.f32.partialorder %v593, 0.0
        %vm916 = vcmp.ge.f32.partialorder %v762, 0.0
        %vm917 = vcmp.ge.f32.partialorder %v596, 0.0
        %vm918 = vcmp.ge.f32.partialorder %v765, 0.0
        %vm919 = vcmp.ge.f32.partialorder %v598, 0.0
        %vm920 = vcmp.ge.f32.partialorder %v767, 0.0
        %vm921 = vcmp.ge.f32.partialorder %v601, 0.0
        %vm922 = vcmp.ge.f32.partialorder %v770, 0.0
        %vm923 = vcmp.ge.f32.partialorder %v603, 0.0
        %vm924 = vcmp.ge.f32.partialorder %v772, 0.0
        %vm925 = vcmp.ge.f32.partialorder %v606, 0.0
        %vm926 = vcmp.ge.f32.partialorder %v775, 0.0
        %vm927 = vcmp.ge.f32.partialorder %v608, 0.0
        %vm928 = vcmp.ge.f32.partialorder %v777, 0.0
        %vm929 = vcmp.ge.f32.partialorder %v611, 0.0
        %vm930 = vcmp.ge.f32.partialorder %v780, 0.0
        %vm931 = vcmp.ge.f32.partialorder %v613, 0.0
        %vm932 = vcmp.ge.f32.partialorder %v782, 0.0
        %vm933 = vcmp.ge.f32.partialorder %v616, 0.0
        %vm934 = vcmp.ge.f32.partialorder %v785, 0.0
        %vm935 = vcmp.ge.f32.partialorder %v618, 0.0
        %vm936 = vcmp.ge.f32.partialorder %v787, 0.0
        %vm937 = vcmp.ge.f32.partialorder %v621, 0.0
        %vm938 = vcmp.ge.f32.partialorder %v790, 0.0
        %vm939 = vcmp.ge.f32.partialorder %v623, 0.0
        %vm940 = vcmp.ge.f32.partialorder %v792, 0.0
        %vm941 = vcmp.ge.f32.partialorder %v626, 0.0
        %vm942 = vcmp.ge.f32.partialorder %v795, 0.0
        %vm943 = vcmp.ge.f32.partialorder %v628, 0.0
        %vm944 = vcmp.ge.f32.partialorder %v797, 0.0
        %vm945 = vcmp.ge.f32.partialorder %v631, 0.0
        %vm946 = vcmp.ge.f32.partialorder %v800, 0.0
        %vm947 = vcmp.ge.f32.partialorder %v633, 0.0
        %vm948 = vcmp.ge.f32.partialorder %v802, 0.0
        %vm949 = vcmp.ge.f32.partialorder %v636, 0.0
        %vm950 = vcmp.ge.f32.partialorder %v805, 0.0
        %vm951 = vcmp.ge.f32.partialorder %v638, 0.0
        %vm952 = vcmp.ge.f32.partialorder %v807, 0.0
        %vm953 = vcmp.ge.f32.partialorder %v641, 0.0
        %vm954 = vcmp.ge.f32.partialorder %v810, 0.0
        %vm955 = vcmp.ge.f32.partialorder %v643, 0.0
        %vm956 = vcmp.ge.f32.partialorder %v812, 0.0
        %vm957 = vcmp.ge.f32.partialorder %v646, 0.0
        %vm958 = vcmp.ge.f32.partialorder %v815, 0.0
        %vm959 = vcmp.ge.f32.partialorder %v648, 0.0
        %vm960 = vcmp.ge.f32.partialorder %v817, 0.0
        %vm961 = vcmp.ge.f32.partialorder %v651, 0.0
        %vm962 = vcmp.ge.f32.partialorder %v820, 0.0
        %vm963 = vcmp.ge.f32.partialorder %v653, 0.0
        %vm964 = vcmp.ge.f32.partialorder %v822, 0.0
        %vm965 = vcmp.ge.f32.partialorder %v656, 0.0
        %vm966 = vcmp.ge.f32.partialorder %v825, 0.0
        %vm967 = vcmp.ge.f32.partialorder %v658, 0.0
        %vm968 = vcmp.ge.f32.partialorder %v827, 0.0
        %vm969 = vcmp.ge.f32.partialorder %v661, 0.0
        %vm970 = vcmp.ge.f32.partialorder %v830, 0.0
        %vm971 = vcmp.ge.f32.partialorder %v663, 0.0
        %vm972 = vcmp.ge.f32.partialorder %v832, 0.0
        %vm973 = vcmp.ge.f32.partialorder %v666, 0.0
        %vm974 = vcmp.ge.f32.partialorder %v835, 0.0
        %vm975 = vcmp.ge.f32.partialorder %v668, 0.0
        %vm976 = vcmp.ge.f32.partialorder %v837, 0.0
        %vm977 = vcmp.ge.f32.partialorder %v671, 0.0
        %vm978 = vcmp.ge.f32.partialorder %v840, 0.0
        %vm979 = vcmp.ge.f32.partialorder %v673, 0.0
        %vm980 = vcmp.ge.f32.partialorder %v842, 0.0
        %vm981 = vcmp.ge.f32.partialorder %v676, 0.0
        %vm982 = vcmp.ge.f32.partialorder %v845, 0.0
        %vm983 = vcmp.ge.f32.partialorder %v678, 0.0
        %vm984 = vcmp.ge.f32.partialorder %v847, 0.0
        %vm985 = vcmp.ge.f32.partialorder %v681, 0.0
        %vm986 = vcmp.ge.f32.partialorder %v850, 0.0
        %vm987 = vcmp.ge.f32.partialorder %v683, 0.0
        %vm988 = vcmp.ge.f32.partialorder %v852, 0.0
        %vm989 = vcmp.ge.f32.partialorder %v686, 0.0
        %vm990 = vcmp.ge.f32.partialorder %v855, 0.0
        %vm991 = vcmp.ge.f32.partialorder %v688, 0.0
        %vm992 = vcmp.ge.f32.partialorder %v857, 0.0
        %vm993 = vcmp.ge.f32.partialorder %v691, 0.0
        %vm994 = vcmp.ge.f32.partialorder %v860, 0.0
        %vm995 = vcmp.ge.f32.partialorder %v693, 0.0
        %vm996 = vcmp.ge.f32.partialorder %v862, 0.0
        %vm997 = vcmp.ge.f32.partialorder %v696, 0.0
        %vm998 = vcmp.ge.f32.partialorder %v865, 0.0
        %vm999 = vcmp.ge.f32.partialorder %v698, 0.0
        %vm1000 = vcmp.ge.f32.partialorder %v867, 0.0
        %vm1001 = vcmp.ge.f32.partialorder %v701, 0.0
        %vm1002 = vcmp.ge.f32.partialorder %v870, 0.0
        %vm1003 = vcmp.ge.f32.partialorder %v703, 0.0
        %vm1004 = vcmp.ge.f32.partialorder %v872, 0.0
        %vm1005 = vcmp.ge.f32.partialorder %v706, 0.0
        %vm1006 = vcmp.ge.f32.partialorder %v875, 0.0
        %vm1007 = vcmp.ge.f32.partialorder %v708, 0.0
        %vm1008 = vcmp.ge.f32.partialorder %v877, 0.0
        %vm1009 = vcmp.ge.f32.partialorder %v711, 0.0
        %vm1010 = vcmp.ge.f32.partialorder %v880, 0.0
        %vm1011 = vcmp.ge.f32.partialorder %v713, 0.0
        %vm1012 = vcmp.ge.f32.partialorder %v882, 0.0
        %vm1013 = vcmp.ge.f32.partialorder %v716, 0.0
        %vm1014 = vcmp.ge.f32.partialorder %v885, 0.0
        %vm1015 = vcmp.ge.f32.partialorder %v718, 0.0
        %vm1016 = vcmp.ge.f32.partialorder %v887, 0.0
        %v1017 = vmul.f32 %v561, 0.2
        %v1018 = vmul.f32 %v730, 0.2
        %v1019 = vmul.f32 %v563, 0.2
        %v1020 = vmul.f32 %v732, 0.2
        %v1021 = vmul.f32 %v566, 0.2
        %v1022 = vmul.f32 %v735, 0.2
        %v1023 = vmul.f32 %v568, 0.2
        %v1024 = vmul.f32 %v737, 0.2
        %v1025 = vmul.f32 %v571, 0.2
        %v1026 = vmul.f32 %v740, 0.2
        %v1027 = vmul.f32 %v573, 0.2
        %v1028 = vmul.f32 %v742, 0.2
        %v1029 = vmul.f32 %v576, 0.2
        %v1030 = vmul.f32 %v745, 0.2
        %v1031 = vmul.f32 %v578, 0.2
        %v1032 = vmul.f32 %v747, 0.2
        %v1033 = vmul.f32 %v581, 0.2
        %v1034 = vmul.f32 %v750, 0.2
        %v1035 = vmul.f32 %v583, 0.2
        %v1036 = vmul.f32 %v752, 0.2
        %v1037 = vmul.f32 %v586, 0.2
        %v1038 = vmul.f32 %v755, 0.2
        %v1039 = vmul.f32 %v588, 0.2
        %v1040 = vmul.f32 %v757, 0.2
        %v1041 = vmul.f32 %v591, 0.2
        %v1042 = vmul.f32 %v760, 0.2
        %v1043 = vmul.f32 %v593, 0.2
        %v1044 = vmul.f32 %v762, 0.2
        %v1045 = vmul.f32 %v596, 0.2
        %v1046 = vmul.f32 %v765, 0.2
        %v1047 = vmul.f32 %v598, 0.2
        %v1048 = vmul.f32 %v767, 0.2
        %v1049 = vmul.f32 %v601, 0.2
        %v1050 = vmul.f32 %v770, 0.2
        %v1051 = vmul.f32 %v603, 0.2
        %v1052 = vmul.f32 %v772, 0.2
        %v1053 = vmul.f32 %v606, 0.2
        %v1054 = vmul.f32 %v775, 0.2
        %v1055 = vmul.f32 %v608, 0.2
        %v1056 = vmul.f32 %v777, 0.2
        %v1057 = vmul.f32 %v611, 0.2
        %v1058 = vmul.f32 %v780, 0.2
        %v1059 = vmul.f32 %v613, 0.2
        %v1060 = vmul.f32 %v782, 0.2
        %v1061 = vmul.f32 %v616, 0.2
        %v1062 = vmul.f32 %v785, 0.2
        %v1063 = vmul.f32 %v618, 0.2
        %v1064 = vmul.f32 %v787, 0.2
        %v1065 = vmul.f32 %v621, 0.2
        %v1066 = vmul.f32 %v790, 0.2
        %v1067 = vmul.f32 %v623, 0.2
        %v1068 = vmul.f32 %v792, 0.2
        %v1069 = vmul.f32 %v626, 0.2
        %v1070 = vmul.f32 %v795, 0.2
        %v1071 = vmul.f32 %v628, 0.2
        %v1072 = vmul.f32 %v797, 0.2
        %v1073 = vmul.f32 %v631, 0.2
        %v1074 = vmul.f32 %v800, 0.2
        %v1075 = vmul.f32 %v633, 0.2
        %v1076 = vmul.f32 %v802, 0.2
        %v1077 = vmul.f32 %v636, 0.2
        %v1078 = vmul.f32 %v805, 0.2
        %v1079 = vmul.f32 %v638, 0.2
        %v1080 = vmul.f32 %v807, 0.2
        %v1081 = vmul.f32 %v641, 0.2
        %v1082 = vmul.f32 %v810, 0.2
        %v1083 = vmul.f32 %v643, 0.2
        %v1084 = vmul.f32 %v812, 0.2
        %v1085 = vmul.f32 %v646, 0.2
        %v1086 = vmul.f32 %v815, 0.2
        %v1087 = vmul.f32 %v648, 0.2
        %v1088 = vmul.f32 %v817, 0.2
        %v1089 = vmul.f32 %v651, 0.2
        %v1090 = vmul.f32 %v820, 0.2
        %v1091 = vmul.f32 %v653, 0.2
        %v1092 = vmul.f32 %v822, 0.2
        %v1093 = vmul.f32 %v656, 0.2
        %v1094 = vmul.f32 %v825, 0.2
        %v1095 = vmul.f32 %v658, 0.2
        %v1096 = vmul.f32 %v827, 0.2
        %v1097 = vmul.f32 %v661, 0.2
        %v1098 = vmul.f32 %v830, 0.2
        %v1099 = vmul.f32 %v663, 0.2
        %v1100 = vmul.f32 %v832, 0.2
        %v1101 = vmul.f32 %v666, 0.2
        %v1102 = vmul.f32 %v835, 0.2
        %v1103 = vmul.f32 %v668, 0.2
        %v1104 = vmul.f32 %v837, 0.2
        %v1105 = vmul.f32 %v671, 0.2
        %v1106 = vmul.f32 %v840, 0.2
        %v1107 = vmul.f32 %v673, 0.2
        %v1108 = vmul.f32 %v842, 0.2
        %v1109 = vmul.f32 %v676, 0.2
        %v1110 = vmul.f32 %v845, 0.2
        %v1111 = vmul.f32 %v678, 0.2
        %v1112 = vmul.f32 %v847, 0.2
        %v1113 = vmul.f32 %v681, 0.2
        %v1114 = vmul.f32 %v850, 0.2
        %v1115 = vmul.f32 %v683, 0.2
        %v1116 = vmul.f32 %v852, 0.2
        %v1117 = vmul.f32 %v686, 0.2
        %v1118 = vmul.f32 %v855, 0.2
        %v1119 = vmul.f32 %v688, 0.2
        %v1120 = vmul.f32 %v857, 0.2
        %v1121 = vmul.f32 %v691, 0.2
        %v1122 = vmul.f32 %v860, 0.2
        %v1123 = vmul.f32 %v693, 0.2
        %v1124 = vmul.f32 %v862, 0.2
        %v1125 = vmul.f32 %v696, 0.2
        %v1126 = vmul.f32 %v865, 0.2
        %v1127 = vmul.f32 %v698, 0.2
        %v1128 = vmul.f32 %v867, 0.2
        %v1129 = vmul.f32 %v701, 0.2
        %v1130 = vmul.f32 %v870, 0.2
        %v1131 = vmul.f32 %v703, 0.2
        %v1132 = vmul.f32 %v872, 0.2
        %v1133 = vmul.f32 %v706, 0.2
        %v1134 = vmul.f32 %v875, 0.2
        %v1135 = vmul.f32 %v708, 0.2
        %v1136 = vmul.f32 %v877, 0.2
        %v1137 = vmul.f32 %v711, 0.2
        %v1138 = vmul.f32 %v880, 0.2
        %v1139 = vmul.f32 %v713, 0.2
        %v1140 = vmul.f32 %v882, 0.2
        %v1141 = vmul.f32 %v716, 0.2
        %v1142 = vmul.f32 %v885, 0.2
        %v1143 = vmul.f32 %v718, 0.2
        %v1144 = vmul.f32 %v887, 0.2
        %v1145 = vsel %vm889, %v561, %v1017
        %v1146 = vsel %vm890, %v730, %v1018
        %v1147 = vsel %vm891, %v563, %v1019
        %v1148 = vsel %vm892, %v732, %v1020
        %v1149 = vsel %vm893, %v566, %v1021
        %v1150 = vsel %vm894, %v735, %v1022
        %v1151 = vsel %vm895, %v568, %v1023
        %v1152 = vsel %vm896, %v737, %v1024
        %v1153 = vsel %vm897, %v571, %v1025
        %v1154 = vsel %vm898, %v740, %v1026
        %v1155 = vsel %vm899, %v573, %v1027
        %v1156 = vsel %vm900, %v742, %v1028
        %v1157 = vsel %vm901, %v576, %v1029
        %v1158 = vsel %vm902, %v745, %v1030
        %v1159 = vsel %vm903, %v578, %v1031
        %v1160 = vsel %vm904, %v747, %v1032
        %v1161 = vsel %vm905, %v581, %v1033
        %v1162 = vsel %vm906, %v750, %v1034
        %v1163 = vsel %vm907, %v583, %v1035
        %v1164 = vsel %vm908, %v752, %v1036
        %v1165 = vsel %vm909, %v586, %v1037
        %v1166 = vsel %vm910, %v755, %v1038
        %v1167 = vsel %vm911, %v588, %v1039
        %v1168 = vsel %vm912, %v757, %v1040
        %v1169 = vsel %vm913, %v591, %v1041
        %v1170 = vsel %vm914, %v760, %v1042
        %v1171 = vsel %vm915, %v593, %v1043
        %v1172 = vsel %vm916, %v762, %v1044
        %v1173 = vsel %vm917, %v596, %v1045
        %v1174 = vsel %vm918, %v765, %v1046
        %v1175 = vsel %vm919, %v598, %v1047
        %v1176 = vsel %vm920, %v767, %v1048
        %v1177 = vsel %vm921, %v601, %v1049
        %v1178 = vsel %vm922, %v770, %v1050
        %v1179 = vsel %vm923, %v603, %v1051
        %v1180 = vsel %vm924, %v772, %v1052
        %v1181 = vsel %vm925, %v606, %v1053
        %v1182 = vsel %vm926, %v775, %v1054
        %v1183 = vsel %vm927, %v608, %v1055
        %v1184 = vsel %vm928, %v777, %v1056
        %v1185 = vsel %vm929, %v611, %v1057
        %v1186 = vsel %vm930, %v780, %v1058
        %v1187 = vsel %vm931, %v613, %v1059
        %v1188 = vsel %vm932, %v782, %v1060
        %v1189 = vsel %vm933, %v616, %v1061
        %v1190 = vsel %vm934, %v785, %v1062
        %v1191 = vsel %vm935, %v618, %v1063
        %v1192 = vsel %vm936, %v787, %v1064
        %v1193 = vsel %vm937, %v621, %v1065
        %v1194 = vsel %vm938, %v790, %v1066
        %v1195 = vsel %vm939, %v623, %v1067
        %v1196 = vsel %vm940, %v792, %v1068
        %v1197 = vsel %vm941, %v626, %v1069
        %v1198 = vsel %vm942, %v795, %v1070
        %v1199 = vsel %vm943, %v628, %v1071
        %v1200 = vsel %vm944, %v797, %v1072
        %v1201 = vsel %vm945, %v631, %v1073
        %v1202 = vsel %vm946, %v800, %v1074
        %v1203 = vsel %vm947, %v633, %v1075
        %v1204 = vsel %vm948, %v802, %v1076
        %v1205 = vsel %vm949, %v636, %v1077
        %v1206 = vsel %vm950, %v805, %v1078
        %v1207 = vsel %vm951, %v638, %v1079
        %v1208 = vsel %vm952, %v807, %v1080
        %v1209 = vsel %vm953, %v641, %v1081
        %v1210 = vsel %vm954, %v810, %v1082
        %v1211 = vsel %vm955, %v643, %v1083
        %v1212 = vsel %vm956, %v812, %v1084
        %v1213 = vsel %vm957, %v646, %v1085
        %v1214 = vsel %vm958, %v815, %v1086
        %v1215 = vsel %vm959, %v648, %v1087
        %v1216 = vsel %vm960, %v817, %v1088
        %v1217 = vsel %vm961, %v651, %v1089
        %v1218 = vsel %vm962, %v820, %v1090
        %v1219 = vsel %vm963, %v653, %v1091
        %v1220 = vsel %vm964, %v822, %v1092
        %v1221 = vsel %vm965, %v656, %v1093
        %v1222 = vsel %vm966, %v825, %v1094
        %v1223 = vsel %vm967, %v658, %v1095
        %v1224 = vsel %vm968, %v827, %v1096
        %v1225 = vsel %vm969, %v661, %v1097
        %v1226 = vsel %vm970, %v830, %v1098
        %v1227 = vsel %vm971, %v663, %v1099
        %v1228 = vsel %vm972, %v832, %v1100
        %v1229 = vsel %vm973, %v666, %v1101
        %v1230 = vsel %vm974, %v835, %v1102
        %v1231 = vsel %vm975, %v668, %v1103
        %v1232 = vsel %vm976, %v837, %v1104
        %v1233 = vsel %vm977, %v671, %v1105
        %v1234 = vsel %vm978, %v840, %v1106
        %v1235 = vsel %vm979, %v673, %v1107
        %v1236 = vsel %vm980, %v842, %v1108
        %v1237 = vsel %vm981, %v676, %v1109
        %v1238 = vsel %vm982, %v845, %v1110
        %v1239 = vsel %vm983, %v678, %v1111
        %v1240 = vsel %vm984, %v847, %v1112
        %v1241 = vsel %vm985, %v681, %v1113
        %v1242 = vsel %vm986, %v850, %v1114
        %v1243 = vsel %vm987, %v683, %v1115
        %v1244 = vsel %vm988, %v852, %v1116
        %v1245 = vsel %vm989, %v686, %v1117
        %v1246 = vsel %vm990, %v855, %v1118
        %v1247 = vsel %vm991, %v688, %v1119
        %v1248 = vsel %vm992, %v857, %v1120
        %v1249 = vsel %vm993, %v691, %v1121
        %v1250 = vsel %vm994, %v860, %v1122
        %v1251 = vsel %vm995, %v693, %v1123
        %v1252 = vsel %vm996, %v862, %v1124
        %v1253 = vsel %vm997, %v696, %v1125
        %v1254 = vsel %vm998, %v865, %v1126
        %v1255 = vsel %vm999, %v698, %v1127
        %v1256 = vsel %vm1000, %v867, %v1128
        %v1257 = vsel %vm1001, %v701, %v1129
        %v1258 = vsel %vm1002, %v870, %v1130
        %v1259 = vsel %vm1003, %v703, %v1131
        %v1260 = vsel %vm1004, %v872, %v1132
        %v1261 = vsel %vm1005, %v706, %v1133
        %v1262 = vsel %vm1006, %v875, %v1134
        %v1263 = vsel %vm1007, %v708, %v1135
        %v1264 = vsel %vm1008, %v877, %v1136
        %v1265 = vsel %vm1009, %v711, %v1137
        %v1266 = vsel %vm1010, %v880, %v1138
        %v1267 = vsel %vm1011, %v713, %v1139
        %v1268 = vsel %vm1012, %v882, %v1140
        %v1269 = vsel %vm1013, %v716, %v1141
        %v1270 = vsel %vm1014, %v885, %v1142
        %v1271 = vsel %vm1015, %v718, %v1143
        %v1272 = vsel %vm1016, %v887, %v1144
        %v1273 = vmul.f32 %v1145, 1.4142135
        %v1274 = vmul.f32 %v1146, 1.4142135
        %v1275 = vmul.f32 %v1147, 1.4142135
        %v1276 = vmul.f32 %v1148, 1.4142135
        %v1277 = vmul.f32 %v1149, 1.4142135
        %v1278 = vmul.f32 %v1150, 1.4142135
        %v1279 = vmul.f32 %v1151, 1.4142135
        %v1280 = vmul.f32 %v1152, 1.4142135
        %v1281 = vmul.f32 %v1153, 1.4142135
        %v1282 = vmul.f32 %v1154, 1.4142135
        %v1283 = vmul.f32 %v1155, 1.4142135
        %v1284 = vmul.f32 %v1156, 1.4142135
        %v1285 = vmul.f32 %v1157, 1.4142135
        %v1286 = vmul.f32 %v1158, 1.4142135
        %v1287 = vmul.f32 %v1159, 1.4142135
        %v1288 = vmul.f32 %v1160, 1.4142135
        %v1289 = vmul.f32 %v1161, 1.4142135
        %v1290 = vmul.f32 %v1162, 1.4142135
        %v1291 = vmul.f32 %v1163, 1.4142135
        %v1292 = vmul.f32 %v1164, 1.4142135
        %v1293 = vmul.f32 %v1165, 1.4142135
        %v1294 = vmul.f32 %v1166, 1.4142135
        %v1295 = vmul.f32 %v1167, 1.4142135
        %v1296 = vmul.f32 %v1168, 1.4142135
        %v1297 = vmul.f32 %v1169, 1.4142135
        %v1298 = vmul.f32 %v1170, 1.4142135
        %v1299 = vmul.f32 %v1171, 1.4142135
        %v1300 = vmul.f32 %v1172, 1.4142135
        %v1301 = vmul.f32 %v1173, 1.4142135
        %v1302 = vmul.f32 %v1174, 1.4142135
        %v1303 = vmul.f32 %v1175, 1.4142135
        %v1304 = vmul.f32 %v1176, 1.4142135
        %v1305 = vmul.f32 %v1177, 1.4142135
        %v1306 = vmul.f32 %v1178, 1.4142135
        %v1307 = vmul.f32 %v1179, 1.4142135
        %v1308 = vmul.f32 %v1180, 1.4142135
        %v1309 = vmul.f32 %v1181, 1.4142135
        %v1310 = vmul.f32 %v1182, 1.4142135
        %v1311 = vmul.f32 %v1183, 1.4142135
        %v1312 = vmul.f32 %v1184, 1.4142135
        %v1313 = vmul.f32 %v1185, 1.4142135
        %v1314 = vmul.f32 %v1186, 1.4142135
        %v1315 = vmul.f32 %v1187, 1.4142135
        %v1316 = vmul.f32 %v1188, 1.4142135
        %v1317 = vmul.f32 %v1189, 1.4142135
        %v1318 = vmul.f32 %v1190, 1.4142135
        %v1319 = vmul.f32 %v1191, 1.4142135
        %v1320 = vmul.f32 %v1192, 1.4142135
        %v1321 = vmul.f32 %v1193, 1.4142135
        %v1322 = vmul.f32 %v1194, 1.4142135
        %v1323 = vmul.f32 %v1195, 1.4142135
        %v1324 = vmul.f32 %v1196, 1.4142135
        %v1325 = vmul.f32 %v1197, 1.4142135
        %v1326 = vmul.f32 %v1198, 1.4142135
        %v1327 = vmul.f32 %v1199, 1.4142135
        %v1328 = vmul.f32 %v1200, 1.4142135
        %v1329 = vmul.f32 %v1201, 1.4142135
        %v1330 = vmul.f32 %v1202, 1.4142135
        %v1331 = vmul.f32 %v1203, 1.4142135
        %v1332 = vmul.f32 %v1204, 1.4142135
        %v1333 = vmul.f32 %v1205, 1.4142135
        %v1334 = vmul.f32 %v1206, 1.4142135
        %v1335 = vmul.f32 %v1207, 1.4142135
        %v1336 = vmul.f32 %v1208, 1.4142135
        %v1337 = vmul.f32 %v1209, 1.4142135
        %v1338 = vmul.f32 %v1210, 1.4142135
        %v1339 = vmul.f32 %v1211, 1.4142135
        %v1340 = vmul.f32 %v1212, 1.4142135
        %v1341 = vmul.f32 %v1213, 1.4142135
        %v1342 = vmul.f32 %v1214, 1.4142135
        %v1343 = vmul.f32 %v1215, 1.4142135
        %v1344 = vmul.f32 %v1216, 1.4142135
        %v1345 = vmul.f32 %v1217, 1.4142135
        %v1346 = vmul.f32 %v1218, 1.4142135
        %v1347 = vmul.f32 %v1219, 1.4142135
        %v1348 = vmul.f32 %v1220, 1.4142135
        %v1349 = vmul.f32 %v1221, 1.4142135
        %v1350 = vmul.f32 %v1222, 1.4142135
        %v1351 = vmul.f32 %v1223, 1.4142135
        %v1352 = vmul.f32 %v1224, 1.4142135
        %v1353 = vmul.f32 %v1225, 1.4142135
        %v1354 = vmul.f32 %v1226, 1.4142135
        %v1355 = vmul.f32 %v1227, 1.4142135
        %v1356 = vmul.f32 %v1228, 1.4142135
        %v1357 = vmul.f32 %v1229, 1.4142135
        %v1358 = vmul.f32 %v1230, 1.4142135
        %v1359 = vmul.f32 %v1231, 1.4142135
        %v1360 = vmul.f32 %v1232, 1.4142135
        %v1361 = vmul.f32 %v1233, 1.4142135
        %v1362 = vmul.f32 %v1234, 1.4142135
        %v1363 = vmul.f32 %v1235, 1.4142135
        %v1364 = vmul.f32 %v1236, 1.4142135
        %v1365 = vmul.f32 %v1237, 1.4142135
        %v1366 = vmul.f32 %v1238, 1.4142135
        %v1367 = vmul.f32 %v1239, 1.4142135
        %v1368 = vmul.f32 %v1240, 1.4142135
        %v1369 = vmul.f32 %v1241, 1.4142135
        %v1370 = vmul.f32 %v1242, 1.4142135
        %v1371 = vmul.f32 %v1243, 1.4142135
        %v1372 = vmul.f32 %v1244, 1.4142135
        %v1373 = vmul.f32 %v1245, 1.4142135
        %v1374 = vmul.f32 %v1246, 1.4142135
        %v1375 = vmul.f32 %v1247, 1.4142135
        %v1376 = vmul.f32 %v1248, 1.4142135
        %v1377 = vmul.f32 %v1249, 1.4142135
        %v1378 = vmul.f32 %v1250, 1.4142135
        %v1379 = vmul.f32 %v1251, 1.4142135
        %v1380 = vmul.f32 %v1252, 1.4142135
        %v1381 = vmul.f32 %v1253, 1.4142135
        %v1382 = vmul.f32 %v1254, 1.4142135
        %v1383 = vmul.f32 %v1255, 1.4142135
        %v1384 = vmul.f32 %v1256, 1.4142135
        %v1385 = vmul.f32 %v1257, 1.4142135
        %v1386 = vmul.f32 %v1258, 1.4142135
        %v1387 = vmul.f32 %v1259, 1.4142135
        %v1388 = vmul.f32 %v1260, 1.4142135
        %v1389 = vmul.f32 %v1261, 1.4142135
        %v1390 = vmul.f32 %v1262, 1.4142135
        %v1391 = vmul.f32 %v1263, 1.4142135
        %v1392 = vmul.f32 %v1264, 1.4142135
        %v1393 = vmul.f32 %v1265, 1.4142135
        %v1394 = vmul.f32 %v1266, 1.4142135
        %v1395 = vmul.f32 %v1267, 1.4142135
        %v1396 = vmul.f32 %v1268, 1.4142135
        %v1397 = vmul.f32 %v1269, 1.4142135
        %v1398 = vmul.f32 %v1270, 1.4142135
        %v1399 = vmul.f32 %v1271, 1.4142135
        %v1400 = vmul.f32 %v1272, 1.4142135
        %v1401 = vpack.c.bf16 %v1274, %v1273
        %v1402 = vpack.c.bf16 %v1276, %v1275
        %v1403 = vpack.c.bf16 %v1278, %v1277
        %v1404 = vpack.c.bf16 %v1280, %v1279
        %v1405 = vpack.c.bf16 %v1282, %v1281
        %v1406 = vpack.c.bf16 %v1284, %v1283
        %v1407 = vpack.c.bf16 %v1286, %v1285
        %v1408 = vpack.c.bf16 %v1288, %v1287
        %v1409 = vpack.c.bf16 %v1290, %v1289
        %v1410 = vpack.c.bf16 %v1292, %v1291
        %v1411 = vpack.c.bf16 %v1294, %v1293
        %v1412 = vpack.c.bf16 %v1296, %v1295
        %v1413 = vpack.c.bf16 %v1298, %v1297
        %v1414 = vpack.c.bf16 %v1300, %v1299
        %v1415 = vpack.c.bf16 %v1302, %v1301
        %v1416 = vpack.c.bf16 %v1304, %v1303
        %v1417 = vpack.c.bf16 %v1306, %v1305
        %v1418 = vpack.c.bf16 %v1308, %v1307
        %v1419 = vpack.c.bf16 %v1310, %v1309
        %v1420 = vpack.c.bf16 %v1312, %v1311
        %v1421 = vpack.c.bf16 %v1314, %v1313
        %v1422 = vpack.c.bf16 %v1316, %v1315
        %v1423 = vpack.c.bf16 %v1318, %v1317
        %v1424 = vpack.c.bf16 %v1320, %v1319
        %v1425 = vpack.c.bf16 %v1322, %v1321
        %v1426 = vpack.c.bf16 %v1324, %v1323
        %v1427 = vpack.c.bf16 %v1326, %v1325
        %v1428 = vpack.c.bf16 %v1328, %v1327
        %v1429 = vpack.c.bf16 %v1330, %v1329
        %v1430 = vpack.c.bf16 %v1332, %v1331
        %v1431 = vpack.c.bf16 %v1334, %v1333
        %v1432 = vpack.c.bf16 %v1336, %v1335
        %v1433 = vpack.c.bf16 %v1338, %v1337
        %v1434 = vpack.c.bf16 %v1340, %v1339
        %v1435 = vpack.c.bf16 %v1342, %v1341
        %v1436 = vpack.c.bf16 %v1344, %v1343
        %v1437 = vpack.c.bf16 %v1346, %v1345
        %v1438 = vpack.c.bf16 %v1348, %v1347
        %v1439 = vpack.c.bf16 %v1350, %v1349
        %v1440 = vpack.c.bf16 %v1352, %v1351
        %v1441 = vpack.c.bf16 %v1354, %v1353
        %v1442 = vpack.c.bf16 %v1356, %v1355
        %v1443 = vpack.c.bf16 %v1358, %v1357
        %v1444 = vpack.c.bf16 %v1360, %v1359
        %v1445 = vpack.c.bf16 %v1362, %v1361
        %v1446 = vpack.c.bf16 %v1364, %v1363
        %v1447 = vpack.c.bf16 %v1366, %v1365
        %v1448 = vpack.c.bf16 %v1368, %v1367
        %v1449 = vpack.c.bf16 %v1370, %v1369
        %v1450 = vpack.c.bf16 %v1372, %v1371
        %v1451 = vpack.c.bf16 %v1374, %v1373
        %v1452 = vpack.c.bf16 %v1376, %v1375
        %v1453 = vpack.c.bf16 %v1378, %v1377
        %v1454 = vpack.c.bf16 %v1380, %v1379
        %v1455 = vpack.c.bf16 %v1382, %v1381
        %v1456 = vpack.c.bf16 %v1384, %v1383
        %v1457 = vpack.c.bf16 %v1386, %v1385
        %v1458 = vpack.c.bf16 %v1388, %v1387
        %v1459 = vpack.c.bf16 %v1390, %v1389
        %v1460 = vpack.c.bf16 %v1392, %v1391
        %v1461 = vpack.c.bf16 %v1394, %v1393
        %v1462 = vpack.c.bf16 %v1396, %v1395
        %v1463 = vpack.c.bf16 %v1398, %v1397
        %v1464 = vpack.c.bf16 %v1400, %v1399
        %1465 = vst [vmem:[%s192] sm:$0xff] %v1401
        %1466 = vst [vmem:[%s192 + $0x8] sm:$0xff] %v1402
        %1467 = vst [vmem:[%s192 + $0x10] sm:$0xff] %v1403
        %1468 = vst [vmem:[%s192 + $0x18] sm:$0xff] %v1404
        %1469 = vst [vmem:[%s192 + $0x20] sm:$0xff] %v1405
        %1470 = vst [vmem:[%s192 + $0x28] sm:$0xff] %v1406
        %1471 = vst [vmem:[%s192 + $0x30] sm:$0xff] %v1407
        %1472 = vst [vmem:[%s192 + $0x38] sm:$0xff] %v1408
        %1473 = vst [vmem:[%s192 + $0x40] sm:$0xff] %v1409
        %1474 = vst [vmem:[%s192 + $0x48] sm:$0xff] %v1410
        %1475 = vst [vmem:[%s192 + $0x50] sm:$0xff] %v1411
        %1476 = vst [vmem:[%s192 + $0x58] sm:$0xff] %v1412
        %1477 = vst [vmem:[%s192 + $0x60] sm:$0xff] %v1413
        %1478 = vst [vmem:[%s192 + $0x68] sm:$0xff] %v1414
        %1479 = vst [vmem:[%s192 + $0x70] sm:$0xff] %v1415
        %1480 = vst [vmem:[%s192 + $0x78] sm:$0xff] %v1416
        %1481 = vst [vmem:[%s192 + $0x80] sm:$0xff] %v1417
        %1482 = vst [vmem:[%s192 + $0x88] sm:$0xff] %v1418
        %1483 = vst [vmem:[%s192 + $0x90] sm:$0xff] %v1419
        %1484 = vst [vmem:[%s192 + $0x98] sm:$0xff] %v1420
        %1485 = vst [vmem:[%s192 + $0xa0] sm:$0xff] %v1421
        %1486 = vst [vmem:[%s192 + $0xa8] sm:$0xff] %v1422
        %1487 = vst [vmem:[%s192 + $0xb0] sm:$0xff] %v1423
        %1488 = vst [vmem:[%s192 + $0xb8] sm:$0xff] %v1424
        %1489 = vst [vmem:[%s192 + $0xc0] sm:$0xff] %v1425
        %1490 = vst [vmem:[%s192 + $0xc8] sm:$0xff] %v1426
        %1491 = vst [vmem:[%s192 + $0xd0] sm:$0xff] %v1427
        %1492 = vst [vmem:[%s192 + $0xd8] sm:$0xff] %v1428
        %1493 = vst [vmem:[%s192 + $0xe0] sm:$0xff] %v1429
        %1494 = vst [vmem:[%s192 + $0xe8] sm:$0xff] %v1430
        %1495 = vst [vmem:[%s192 + $0xf0] sm:$0xff] %v1431
        %1496 = vst [vmem:[%s192 + $0xf8] sm:$0xff] %v1432
        %1497 = vst [vmem:[%s192 + $0x100] sm:$0xff] %v1433
        %1498 = vst [vmem:[%s192 + $0x108] sm:$0xff] %v1434
        %1499 = vst [vmem:[%s192 + $0x110] sm:$0xff] %v1435
        %1500 = vst [vmem:[%s192 + $0x118] sm:$0xff] %v1436
        %1501 = vst [vmem:[%s192 + $0x120] sm:$0xff] %v1437
        %1502 = vst [vmem:[%s192 + $0x128] sm:$0xff] %v1438
        %1503 = vst [vmem:[%s192 + $0x130] sm:$0xff] %v1439
        %1504 = vst [vmem:[%s192 + $0x138] sm:$0xff] %v1440
        %1505 = vst [vmem:[%s192 + $0x140] sm:$0xff] %v1441
        %1506 = vst [vmem:[%s192 + $0x148] sm:$0xff] %v1442
        %1507 = vst [vmem:[%s192 + $0x150] sm:$0xff] %v1443
        %1508 = vst [vmem:[%s192 + $0x158] sm:$0xff] %v1444
        %1509 = vst [vmem:[%s192 + $0x160] sm:$0xff] %v1445
        %1510 = vst [vmem:[%s192 + $0x168] sm:$0xff] %v1446
        %1511 = vst [vmem:[%s192 + $0x170] sm:$0xff] %v1447
        %1512 = vst [vmem:[%s192 + $0x178] sm:$0xff] %v1448
        %1513 = vst [vmem:[%s192 + $0x180] sm:$0xff] %v1449
        %1514 = vst [vmem:[%s192 + $0x188] sm:$0xff] %v1450
        %1515 = vst [vmem:[%s192 + $0x190] sm:$0xff] %v1451
        %1516 = vst [vmem:[%s192 + $0x198] sm:$0xff] %v1452
        %1517 = vst [vmem:[%s192 + $0x1a0] sm:$0xff] %v1453
        %1518 = vst [vmem:[%s192 + $0x1a8] sm:$0xff] %v1454
        %1519 = vst [vmem:[%s192 + $0x1b0] sm:$0xff] %v1455
        %1520 = vst [vmem:[%s192 + $0x1b8] sm:$0xff] %v1456
        %1521 = vst [vmem:[%s192 + $0x1c0] sm:$0xff] %v1457
        %1522 = vst [vmem:[%s192 + $0x1c8] sm:$0xff] %v1458
        %1523 = vst [vmem:[%s192 + $0x1d0] sm:$0xff] %v1459
        %1524 = vst [vmem:[%s192 + $0x1d8] sm:$0xff] %v1460
        %1525 = vst [vmem:[%s192 + $0x1e0] sm:$0xff] %v1461
        %1526 = vst [vmem:[%s192 + $0x1e8] sm:$0xff] %v1462
        %1527 = vst [vmem:[%s192 + $0x1f0] sm:$0xff] %v1463
        %1528 = vst [vmem:[%s192 + $0x1f8] sm:$0xff] %v1464
        %s1529 = sand.u32 %s112, 1
        %s1530 = scalar_lea.sflag [#allocation3], %s1529
        %s1531 = sand.u32 %s112, 1
        %s1532 = smul.addr %s1531, 512
        %s1533 = scalar_lea.vmem [#allocation2], %s1532
        // Predicated region
        $region33: #{tpu_custom_call.1} parent=31 // pred_check
          %p1534 = pneg %p122
        $region34: #{tpu_custom_call.1} parent=31 // pred_check_branch
          %1536 = sbr.rel (%p1534) target = $region36
        $region35: #{tpu_custom_call.1} parent=31 // pred_region
          %s1537 = smul.u32 2, %s22
          %s1538 = smul.u32 2, %s21
          %1540 = vsyncadd %s1530, 0
          %s1541 = smul.addr %s1537, 128
          %s1542 = sadd.s32 %s1538, %s1541
          %s1543 = smul.addr %s1542, 4
          %s1544 = scalar_lea.hbm %s3, %s1543
          %s1545 = sshll.u32 %s1533, 4
          %s1546 = int_to_ptr.vmem [resolvable:$true] %s1545
          %s1547 = sshll.u32 %s1544, 4
          %s1548 = int_to_ptr.hbm [resolvable:$true] %s1547
          %1553 = dma.vmem_to_hbm [thread:$0]  %s1546, 8192, %s1548, %s1530, 128, 256, 8
        $region36: #{tpu_custom_call.1} parent=31 // pred_fallthru
          _
      $region32: #{tpu_custom_call.1} parent=5 // pred_fallthru
        _
      %p1554 = scmp.le.s32.totalorder 2, %s12
      // Predicated region
      $region37: #{tpu_custom_call.1} parent=5 // pred_check
        %p1555 = pneg %p1554
      $region38: #{tpu_custom_call.1} parent=5 // pred_check_branch
        %1557 = sbr.rel (%p1555) target = $region40
      $region39: #{tpu_custom_call.1} parent=5 // pred_region
        %s1558 = ssub.s32 %s12, 2
        // Predicated region
        $region41: #{tpu_custom_call.1} parent=39 // pred_check
          %p1559 = pneg %p128
        $region42: #{tpu_custom_call.1} parent=39 // pred_check_branch
          %1561 = sbr.rel (%p1559) target = $region44
        $region43: #{tpu_custom_call.1} parent=39 // pred_region
          %s1562 = sand.u32 %s113, 1
          %s1563 = scalar_lea.sflag [#allocation3], %s1562
          %s1564 = sand.u32 %s113, 1
          %s1565 = smul.addr %s1564, 512
          %s1566 = scalar_lea.vmem [#allocation2], %s1565
          %1568 = dma.done %s1563, 8192
        $region44: #{tpu_custom_call.1} parent=39 // pred_fallthru
          _
      $region40: #{tpu_custom_call.1} parent=5 // pred_fallthru
        _
    $region6: #{tpu_custom_call.1} parent=1 // loop_footer
      %s16 = sadd.s32 1, %s12
    $region7: #{tpu_custom_call.1} parent=1 // loop_footer_branch
      %11 = sbr.rel target = $region3
    $region8: #{tpu_custom_call.1} parent=1 // loop_exit
      _
    %1569 = vsyncpa [#allocation3], 1
    %s1570 = scalar_lea.sflag [#allocation3], 1
    %1571 = vsyncpa %s1570, 1

</llo_original>
